<compile_context>
chip_gen: v6e
topology: v6e:2x2x1
jax: 0.10.0
libtpu: 0.0.40
codegen_flags: <defaults>
</compile_context>

<pallas_src>
import functools

import jax
import jax.numpy as jnp
from jax.experimental import pallas as pl
from jax.experimental.pallas import tpu as pltpu


def _gru_seq_kernel(x_ref, h0_ref, wih_ref, whh_ref, bpro_ref, bhn_ref,
                    out_ref, hn_ref, *, seq_len, batch_pad, gate_pad):
    T, Bp, GP = seq_len, batch_pad, gate_pad

    # ---- Prologue: input projection for ALL timesteps in one MXU matmul. ----
    # x is time-major, flattened to (T*Bp, D); gi stays 2-D (T*Bp, 3*GP) so the
    # per-step slice below is a contiguous, aligned leading-row block.
    # bpro already contains b_ih (all gates) + b_hh for the r/z gates.
    gi = jnp.dot(x_ref[...], wih_ref[...],
                 preferred_element_type=jnp.float32) + bpro_ref[...]

    whh = whh_ref[...]                                        # (GP, 3*GP)
    b_hn = jnp.broadcast_to(bhn_ref[...], (Bp, GP))           # hoisted broadcast
    h = h0_ref[...]                                           # (Bp, GP), padded lanes == 0

    # ---- Sequential recurrence; fully unrolled (T is small and static). ----
    # TODO(synk): for T much larger than max_seq_len=20 switch to a chunked
    # lax.fori_loop over a VMEM scratch to bound vreg live ranges.
    for t in range(T):
        gi_t = gi[t * Bp:(t + 1) * Bp, :]                     # (Bp, 3*GP), aligned row block
        gh = jnp.dot(h, whh, preferred_element_type=jnp.float32)

        # r and z share one sigmoid over two full (8,128) vregs per row group.
        rz = jax.nn.sigmoid(gi_t[:, :2 * GP] + gh[:, :2 * GP])
        r = rz[:, :GP]
        z = rz[:, GP:]
        n = jnp.tanh(gi_t[:, 2 * GP:] + r * (gh[:, 2 * GP:] + b_hn))
        h = n + z * (h - n)                                   # == (1-z)*n + z*h
        # Padded lanes: gi/gh/b_hn lanes are exactly 0 -> n_pad = 0,
        # z_pad = 0.5, so h_pad stays exactly 0 every step.

        out_ref[t] = h                                        # full-tile, leading-axis store
    hn_ref[...] = h


@functools.partial(jax.jit, static_argnames=("hidden_size",))
def gru_forward(obs, h0, wih_pad, whh_pad, bpro, bhn, *, hidden_size):
    """obs: (B, T, D) f32 batch-first, h0: (B, H) f32.

    Returns (output, h_n2d) with output (B, T, H) and h_n2d (B, H),
    matching torch.nn.GRU(batch_first=True) (h_n gets its leading 1 in the caller).
    """
    B, T, D = obs.shape
    H = hidden_size
    GP = whh_pad.shape[0]                     # per-gate lane padding (>= 128)
    Bp = ((B + 7) // 8) * 8                   # pad batch to full sublanes

    # Wrapper-side layout prep (tiny, fused by XLA under this jit):
    # time-major + batch-padded + flattened input, lane/sublane-padded h0.
    x_tm = jnp.transpose(obs, (1, 0, 2))                          # (T, B, D)
    x_tm = jnp.pad(x_tm, ((0, 0), (0, Bp - B), (0, 0)))           # (T, Bp, D)
    x_flat = x_tm.reshape(T * Bp, D)                              # (T*Bp, D)
    h0_pad = jnp.pad(h0, ((0, Bp - B), (0, GP - H)))              # (Bp, GP)

    kernel = functools.partial(_gru_seq_kernel, seq_len=T, batch_pad=Bp,
                               gate_pad=GP)
    vmem = pltpu.MemorySpace.VMEM

    out_pad, hn_pad = pl.pallas_call(
        kernel,
        out_shape=(
            jax.ShapeDtypeStruct((T, Bp, GP), jnp.float32),
            jax.ShapeDtypeStruct((Bp, GP), jnp.float32),
        ),
        in_specs=[
            pl.BlockSpec(memory_space=vmem),   # x_flat  (T*Bp, D)
            pl.BlockSpec(memory_space=vmem),   # h0_pad  (Bp, GP)
            pl.BlockSpec(memory_space=vmem),   # W_ih^T  (D, 3*GP), gate-lane padded
            pl.BlockSpec(memory_space=vmem),   # W_hh^T  (GP, 3*GP), gate-lane padded
            pl.BlockSpec(memory_space=vmem),   # prologue bias (1, 3*GP)
            pl.BlockSpec(memory_space=vmem),   # b_hn   (1, GP)
        ],
        out_specs=(
            pl.BlockSpec(memory_space=vmem),   # output (T, Bp, GP)
            pl.BlockSpec(memory_space=vmem),   # h_n    (Bp, GP)
        ),
        # Everything resident; raise the scoped ceiling a bit (safe on all gens).
        # TODO(synk): for large B*T, chunk the prologue matmul over T and add a
        # "parallel" batch grid axis to use the 2nd TensorCore on v7x.
        compiler_params=pltpu.CompilerParams(
            vmem_limit_bytes=32 * 1024 * 1024),
    )(x_flat, h0_pad, wih_pad, whh_pad, bpro, bhn)

    # Slice away batch/lane padding and return batch-first.
    output = jnp.transpose(out_pad[:, :B, :H], (1, 0, 2))          # (B, T, H)
    h_last = hn_pad[:B, :H]                                        # (B, H)
    return output, h_last


class ContextModel:
    """JAX/Pallas port of the PyTorch ContextModel (single-layer GRU)."""

    def __init__(self, state_dim, hidden_size=32, max_seq_len=20, key=None):
        self.hidden_size = hidden_size
        self.max_seq_len = 20  # mirrors the PyTorch module, which hardcodes 20
        if key is None:
            key = jax.random.PRNGKey(0)
        k1, k2, k3, k4 = jax.random.split(key, 4)

        H = hidden_size
        D = state_dim
        # PyTorch GRU init: uniform(-1/sqrt(H), 1/sqrt(H)) for all parameters.
        bound = 1.0 / jnp.sqrt(jnp.float32(H))
        self.w_ih = jax.random.uniform(k1, (3 * H, D), jnp.float32, -bound, bound)
        self.w_hh = jax.random.uniform(k2, (3 * H, H), jnp.float32, -bound, bound)
        self.b_ih = jax.random.uniform(k3, (3 * H,), jnp.float32, -bound, bound)
        self.b_hh = jax.random.uniform(k4, (3 * H,), jnp.float32, -bound, bound)

        # ---- Kernel-layout copies, computed once at init. ----
        # Each gate (r, z, n) is zero-padded to GP lanes so gate slices in the
        # kernel are whole-vreg (128-lane aligned) selects.  Padded weight/bias
        # lanes are EXACTLY zero so padded lanes of h stay zero in the kernel.
        GP = max(128, ((H + 127) // 128) * 128)
        self.gate_pad = GP

        def pad_cols(m):                 # (rows, H) -> (rows, GP)
            return jnp.pad(m, ((0, 0), (0, GP - H)))

        def pad_vec(v):                  # (H,) -> (GP,)
            return jnp.pad(v, (0, GP - H))

        w_ih_t = jnp.transpose(self.w_ih)        # (D, 3H)
        w_hh_t = jnp.transpose(self.w_hh)        # (H, 3H)
        self.wih_pad = jnp.concatenate(
            [pad_cols(w_ih_t[:, g * H:(g + 1) * H]) for g in range(3)],
            axis=1).astype(jnp.float32)                              # (D, 3*GP)
        whh_rows = jnp.concatenate(
            [pad_cols(w_hh_t[:, g * H:(g + 1) * H]) for g in range(3)],
            axis=1)                                                   # (H, 3*GP)
        self.whh_pad = jnp.pad(
            whh_rows, ((0, GP - H), (0, 0))).astype(jnp.float32)      # (GP, 3*GP)

        b_ir, b_iz, b_in = (self.b_ih[g * H:(g + 1) * H] for g in range(3))
        b_hr, b_hz, b_hn = (self.b_hh[g * H:(g + 1) * H] for g in range(3))
        # Prologue bias: b_ih (all gates) + b_hh for r/z only (fold once);
        # only b_hn must be applied per step inside r*(.) (PyTorch semantics).
        self.bpro = jnp.concatenate(
            [pad_vec(b_ir + b_hr), pad_vec(b_iz + b_hz), pad_vec(b_in)]
        ).reshape(1, 3 * GP).astype(jnp.float32)                      # (1, 3*GP)
        self.bhn = pad_vec(b_hn).reshape(1, GP).astype(jnp.float32)   # (1, GP)

    def __call__(self, obs, state=None):
        obs = jnp.asarray(obs, jnp.float32)
        if obs.ndim == 1:
            obs = obs[None]
        if obs.ndim == 2:
            obs = obs[None]
        B = obs.shape[0]
        if state is None:
            h0 = jnp.zeros((B, self.hidden_size), jnp.float32)
        else:
            state = jnp.asarray(state, jnp.float32)
            if state.ndim == 1:
                state = state[None]
            if state.ndim == 2:
                state = state[None]
            h0 = state[0]
        output, h_last = gru_forward(obs, h0, self.wih_pad, self.whh_pad,
                                     self.bpro, self.bhn,
                                     hidden_size=self.hidden_size)
        return output, h_last[None]               # h_n: (1, B, H)


def _gru_reference(obs, h0, w_ih, w_hh, b_ih, b_hh):
    """Pure-JAX reference matching torch.nn.GRU semantics."""
    H = w_hh.shape[1]

    def step(h, x):
        gi = x @ w_ih.T + b_ih
        gh = h @ w_hh.T + b_hh
        r = jax.nn.sigmoid(gi[:, :H] + gh[:, :H])
        z = jax.nn.sigmoid(gi[:, H:2 * H] + gh[:, H:2 * H])
        n = jnp.tanh(gi[:, 2 * H:] + r * gh[:, 2 * H:])
        h_new = (1.0 - z) * n + z * h
        return h_new, h_new

    x_tm = jnp.transpose(obs, (1, 0, 2))
    h_last, outs = jax.lax.scan(step, h0[0], x_tm)
    return jnp.transpose(outs, (1, 0, 2)), h_last[None]


if __name__ == "__main__":
    key = jax.random.PRNGKey(0)
    k_obs, k_h, k_params = jax.random.split(key, 3)

    batch, seq, state_dim, hidden = 2, 8, 16, 32
    obs = jax.random.normal(k_obs, (batch, seq, state_dim), jnp.float32)
    h0 = jax.random.normal(k_h, (1, batch, hidden), jnp.float32)

    model = ContextModel(state_dim, hidden_size=hidden, key=k_params)

    out, h_n = model(obs, h0)
    out = jax.block_until_ready(out)
    h_n = jax.block_until_ready(h_n)

    # Correctness check against a pure-JAX GRU reference.
    out_ref, hn_ref = _gru_reference(obs, h0, model.w_ih, model.w_hh,
                                     model.b_ih, model.b_hh)
    assert out.shape == (batch, seq, hidden)
    assert h_n.shape == (1, batch, hidden)
    assert jnp.allclose(out, out_ref, atol=1e-5, rtol=1e-5)
    assert jnp.allclose(h_n, hn_ref, atol=1e-5, rtol=1e-5)

    # Also exercise the state=None path once.
    out2, h_n2 = model(obs, None)
    jax.block_until_ready(out2)
    out2_ref, hn2_ref = _gru_reference(obs, jnp.zeros_like(h0), model.w_ih,
                                       model.w_hh, model.b_ih, model.b_hh)
    assert jnp.allclose(out2, out2_ref, atol=1e-5, rtol=1e-5)
    assert jnp.allclose(h_n2, hn2_ref, atol=1e-5, rtol=1e-5)

    print("KERNEL_OK")
</pallas_src>

<mosaic_0001>
module attributes {stable_mosaic.version = 11 : i64} {
  func.func @_gru_seq_kernel(%arg0: memref<64x16xf32, #tpu.memory_space<vmem>>, %arg1: memref<8x128xf32, #tpu.memory_space<vmem>>, %arg2: memref<16x384xf32, #tpu.memory_space<vmem>>, %arg3: memref<128x384xf32, #tpu.memory_space<vmem>>, %arg4: memref<1x384xf32, #tpu.memory_space<vmem>>, %arg5: memref<1x128xf32, #tpu.memory_space<vmem>>, %arg6: memref<8x8x128xf32, #tpu.memory_space<vmem>>, %arg7: memref<8x128xf32, #tpu.memory_space<vmem>>) attributes {dimension_semantics = [], scalar_prefetch = 0 : i64, scratch_operands = 0 : i64, tpu.core_type = #tpu.core_type<tc>} {
    %c0 = arith.constant 0 : index
    %c0_0 = arith.constant 0 : index
    %0 = vector.load %arg0[%c0, %c0_0] : memref<64x16xf32, #tpu.memory_space<vmem>>, vector<64x16xf32>
    %c0_1 = arith.constant 0 : index
    %c0_2 = arith.constant 0 : index
    %1 = vector.load %arg2[%c0_1, %c0_2] : memref<16x384xf32, #tpu.memory_space<vmem>>, vector<16x384xf32>
    %cst = arith.constant dense<0.000000e+00> : vector<64x384xf32>
    %2 = tpu.matmul %0, %1, %cst {dimension_numbers = #tpu.dot_dimension_numbers<[1], [0], [0], [1], [0, 0, 1, 1], [], []>} : vector<64x16xf32>, vector<16x384xf32>, vector<64x384xf32> -> vector<64x384xf32>
    %c0_3 = arith.constant 0 : index
    %c0_4 = arith.constant 0 : index
    %3 = vector.load %arg4[%c0_3, %c0_4] : memref<1x384xf32, #tpu.memory_space<vmem>>, vector<1x384xf32>
    %4 = vector.broadcast %3 : vector<1x384xf32> to vector<64x384xf32>
    %5 = arith.addf %2, %4 : vector<64x384xf32>
    %c0_5 = arith.constant 0 : index
    %c0_6 = arith.constant 0 : index
    %6 = vector.load %arg3[%c0_5, %c0_6] : memref<128x384xf32, #tpu.memory_space<vmem>>, vector<128x384xf32>
    %c0_7 = arith.constant 0 : index
    %c0_8 = arith.constant 0 : index
    %7 = vector.load %arg5[%c0_7, %c0_8] : memref<1x128xf32, #tpu.memory_space<vmem>>, vector<1x128xf32>
    %8 = vector.shape_cast %7 : vector<1x128xf32> to vector<1x128xf32>
    %9 = vector.broadcast %8 : vector<1x128xf32> to vector<8x128xf32>
    %c0_9 = arith.constant 0 : index
    %c0_10 = arith.constant 0 : index
    %10 = vector.load %arg1[%c0_9, %c0_10] : memref<8x128xf32, #tpu.memory_space<vmem>>, vector<8x128xf32>
    %11 = vector.extract_strided_slice %5 {offsets = [0, 0], sizes = [8, 384], strides = [1, 1]} : vector<64x384xf32> to vector<8x384xf32>
    %cst_11 = arith.constant dense<0.000000e+00> : vector<8x384xf32>
    %12 = tpu.matmul %10, %6, %cst_11 {dimension_numbers = #tpu.dot_dimension_numbers<[1], [0], [0], [1], [0, 0, 1, 1], [], []>} : vector<8x128xf32>, vector<128x384xf32>, vector<8x384xf32> -> vector<8x384xf32>
    %13 = vector.extract_strided_slice %11 {offsets = [0, 0], sizes = [8, 256], strides = [1, 1]} : vector<8x384xf32> to vector<8x256xf32>
    %14 = vector.extract_strided_slice %12 {offsets = [0, 0], sizes = [8, 256], strides = [1, 1]} : vector<8x384xf32> to vector<8x256xf32>
    %15 = arith.addf %13, %14 : vector<8x256xf32>
    %16 = arith.negf %15 : vector<8x256xf32>
    %17 = math.exp %16 : vector<8x256xf32>
    %cst_12 = arith.constant 1.000000e+00 : f32
    %18 = vector.broadcast %cst_12 : f32 to vector<8x256xf32>
    %19 = arith.addf %18, %17 : vector<8x256xf32>
    %20 = arith.divf %18, %19 : vector<8x256xf32>
    %21 = vector.extract_strided_slice %20 {offsets = [0, 0], sizes = [8, 128], strides = [1, 1]} : vector<8x256xf32> to vector<8x128xf32>
    %22 = vector.extract_strided_slice %20 {offsets = [0, 128], sizes = [8, 128], strides = [1, 1]} : vector<8x256xf32> to vector<8x128xf32>
    %23 = vector.extract_strided_slice %11 {offsets = [0, 256], sizes = [8, 128], strides = [1, 1]} : vector<8x384xf32> to vector<8x128xf32>
    %24 = vector.extract_strided_slice %12 {offsets = [0, 256], sizes = [8, 128], strides = [1, 1]} : vector<8x384xf32> to vector<8x128xf32>
    %25 = arith.addf %24, %9 : vector<8x128xf32>
    %26 = arith.mulf %21, %25 : vector<8x128xf32>
    %27 = arith.addf %23, %26 : vector<8x128xf32>
    %28 = math.tanh %27 : vector<8x128xf32>
    %29 = arith.subf %10, %28 : vector<8x128xf32>
    %30 = arith.mulf %22, %29 : vector<8x128xf32>
    %31 = arith.addf %28, %30 : vector<8x128xf32>
    %c0_13 = arith.constant 0 : index
    %c0_14 = arith.constant 0 : index
    %c0_15 = arith.constant 0 : index
    %32 = vector.load %arg6[%c0_13, %c0_14, %c0_15] : memref<8x8x128xf32, #tpu.memory_space<vmem>>, vector<1x8x128xf32>
    %33 = vector.shape_cast %32 : vector<1x8x128xf32> to vector<8x128xf32>
    %34 = vector.shape_cast %31 : vector<8x128xf32> to vector<1x8x128xf32>
    tpu.vector_store %arg6[%c0_13, %c0_14, %c0_15], %34 {strides = array<i32>} : memref<8x8x128xf32, #tpu.memory_space<vmem>>, vector<1x8x128xf32>,
    %35 = vector.extract_strided_slice %5 {offsets = [8, 0], sizes = [8, 384], strides = [1, 1]} : vector<64x384xf32> to vector<8x384xf32>
    %cst_16 = arith.constant dense<0.000000e+00> : vector<8x384xf32>
    %36 = tpu.matmul %31, %6, %cst_16 {dimension_numbers = #tpu.dot_dimension_numbers<[1], [0], [0], [1], [0, 0, 1, 1], [], []>} : vector<8x128xf32>, vector<128x384xf32>, vector<8x384xf32> -> vector<8x384xf32>
    %37 = vector.extract_strided_slice %35 {offsets = [0, 0], sizes = [8, 256], strides = [1, 1]} : vector<8x384xf32> to vector<8x256xf32>
    %38 = vector.extract_strided_slice %36 {offsets = [0, 0], sizes = [8, 256], strides = [1, 1]} : vector<8x384xf32> to vector<8x256xf32>
    %39 = arith.addf %37, %38 : vector<8x256xf32>
    %40 = arith.negf %39 : vector<8x256xf32>
    %41 = math.exp %40 : vector<8x256xf32>
    %cst_17 = arith.constant 1.000000e+00 : f32
    %42 = vector.broadcast %cst_17 : f32 to vector<8x256xf32>
    %43 = arith.addf %42, %41 : vector<8x256xf32>
    %44 = arith.divf %42, %43 : vector<8x256xf32>
    %45 = vector.extract_strided_slice %44 {offsets = [0, 0], sizes = [8, 128], strides = [1, 1]} : vector<8x256xf32> to vector<8x128xf32>
    %46 = vector.extract_strided_slice %44 {offsets = [0, 128], sizes = [8, 128], strides = [1, 1]} : vector<8x256xf32> to vector<8x128xf32>
    %47 = vector.extract_strided_slice %35 {offsets = [0, 256], sizes = [8, 128], strides = [1, 1]} : vector<8x384xf32> to vector<8x128xf32>
    %48 = vector.extract_strided_slice %36 {offsets = [0, 256], sizes = [8, 128], strides = [1, 1]} : vector<8x384xf32> to vector<8x128xf32>
    %49 = arith.addf %48, %9 : vector<8x128xf32>
    %50 = arith.mulf %45, %49 : vector<8x128xf32>
    %51 = arith.addf %47, %50 : vector<8x128xf32>
    %52 = math.tanh %51 : vector<8x128xf32>
    %53 = arith.subf %31, %52 : vector<8x128xf32>
    %54 = arith.mulf %46, %53 : vector<8x128xf32>
    %55 = arith.addf %52, %54 : vector<8x128xf32>
    %c1 = arith.constant 1 : index
    %c0_18 = arith.constant 0 : index
    %c0_19 = arith.constant 0 : index
    %56 = vector.load %arg6[%c1, %c0_18, %c0_19] : memref<8x8x128xf32, #tpu.memory_space<vmem>>, vector<1x8x128xf32>
    %57 = vector.shape_cast %56 : vector<1x8x128xf32> to vector<8x128xf32>
    %58 = vector.shape_cast %55 : vector<8x128xf32> to vector<1x8x128xf32>
    tpu.vector_store %arg6[%c1, %c0_18, %c0_19], %58 {strides = array<i32>} : memref<8x8x128xf32, #tpu.memory_space<vmem>>, vector<1x8x128xf32>,
    %59 = vector.extract_strided_slice %5 {offsets = [16, 0], sizes = [8, 384], strides = [1, 1]} : vector<64x384xf32> to vector<8x384xf32>
    %cst_20 = arith.constant dense<0.000000e+00> : vector<8x384xf32>
    %60 = tpu.matmul %55, %6, %cst_20 {dimension_numbers = #tpu.dot_dimension_numbers<[1], [0], [0], [1], [0, 0, 1, 1], [], []>} : vector<8x128xf32>, vector<128x384xf32>, vector<8x384xf32> -> vector<8x384xf32>
    %61 = vector.extract_strided_slice %59 {offsets = [0, 0], sizes = [8, 256], strides = [1, 1]} : vector<8x384xf32> to vector<8x256xf32>
    %62 = vector.extract_strided_slice %60 {offsets = [0, 0], sizes = [8, 256], strides = [1, 1]} : vector<8x384xf32> to vector<8x256xf32>
    %63 = arith.addf %61, %62 : vector<8x256xf32>
    %64 = arith.negf %63 : vector<8x256xf32>
    %65 = math.exp %64 : vector<8x256xf32>
    %cst_21 = arith.constant 1.000000e+00 : f32
    %66 = vector.broadcast %cst_21 : f32 to vector<8x256xf32>
    %67 = arith.addf %66, %65 : vector<8x256xf32>
    %68 = arith.divf %66, %67 : vector<8x256xf32>
    %69 = vector.extract_strided_slice %68 {offsets = [0, 0], sizes = [8, 128], strides = [1, 1]} : vector<8x256xf32> to vector<8x128xf32>
    %70 = vector.extract_strided_slice %68 {offsets = [0, 128], sizes = [8, 128], strides = [1, 1]} : vector<8x256xf32> to vector<8x128xf32>
    %71 = vector.extract_strided_slice %59 {offsets = [0, 256], sizes = [8, 128], strides = [1, 1]} : vector<8x384xf32> to vector<8x128xf32>
    %72 = vector.extract_strided_slice %60 {offsets = [0, 256], sizes = [8, 128], strides = [1, 1]} : vector<8x384xf32> to vector<8x128xf32>
    %73 = arith.addf %72, %9 : vector<8x128xf32>
    %74 = arith.mulf %69, %73 : vector<8x128xf32>
    %75 = arith.addf %71, %74 : vector<8x128xf32>
    %76 = math.tanh %75 : vector<8x128xf32>
    %77 = arith.subf %55, %76 : vector<8x128xf32>
    %78 = arith.mulf %70, %77 : vector<8x128xf32>
    %79 = arith.addf %76, %78 : vector<8x128xf32>
    %c2 = arith.constant 2 : index
    %c0_22 = arith.constant 0 : index
    %c0_23 = arith.constant 0 : index
    %80 = vector.load %arg6[%c2, %c0_22, %c0_23] : memref<8x8x128xf32, #tpu.memory_space<vmem>>, vector<1x8x128xf32>
    %81 = vector.shape_cast %80 : vector<1x8x128xf32> to vector<8x128xf32>
    %82 = vector.shape_cast %79 : vector<8x128xf32> to vector<1x8x128xf32>
    tpu.vector_store %arg6[%c2, %c0_22, %c0_23], %82 {strides = array<i32>} : memref<8x8x128xf32, #tpu.memory_space<vmem>>, vector<1x8x128xf32>,
    %83 = vector.extract_strided_slice %5 {offsets = [24, 0], sizes = [8, 384], strides = [1, 1]} : vector<64x384xf32> to vector<8x384xf32>
    %cst_24 = arith.constant dense<0.000000e+00> : vector<8x384xf32>
    %84 = tpu.matmul %79, %6, %cst_24 {dimension_numbers = #tpu.dot_dimension_numbers<[1], [0], [0], [1], [0, 0, 1, 1], [], []>} : vector<8x128xf32>, vector<128x384xf32>, vector<8x384xf32> -> vector<8x384xf32>
    %85 = vector.extract_strided_slice %83 {offsets = [0, 0], sizes = [8, 256], strides = [1, 1]} : vector<8x384xf32> to vector<8x256xf32>
    %86 = vector.extract_strided_slice %84 {offsets = [0, 0], sizes = [8, 256], strides = [1, 1]} : vector<8x384xf32> to vector<8x256xf32>
    %87 = arith.addf %85, %86 : vector<8x256xf32>
    %88 = arith.negf %87 : vector<8x256xf32>
    %89 = math.exp %88 : vector<8x256xf32>
    %cst_25 = arith.constant 1.000000e+00 : f32
    %90 = vector.broadcast %cst_25 : f32 to vector<8x256xf32>
    %91 = arith.addf %90, %89 : vector<8x256xf32>
    %92 = arith.divf %90, %91 : vector<8x256xf32>
    %93 = vector.extract_strided_slice %92 {offsets = [0, 0], sizes = [8, 128], strides = [1, 1]} : vector<8x256xf32> to vector<8x128xf32>
    %94 = vector.extract_strided_slice %92 {offsets = [0, 128], sizes = [8, 128], strides = [1, 1]} : vector<8x256xf32> to vector<8x128xf32>
    %95 = vector.extract_strided_slice %83 {offsets = [0, 256], sizes = [8, 128], strides = [1, 1]} : vector<8x384xf32> to vector<8x128xf32>
    %96 = vector.extract_strided_slice %84 {offsets = [0, 256], sizes = [8, 128], strides = [1, 1]} : vector<8x384xf32> to vector<8x128xf32>
    %97 = arith.addf %96, %9 : vector<8x128xf32>
    %98 = arith.mulf %93, %97 : vector<8x128xf32>
    %99 = arith.addf %95, %98 : vector<8x128xf32>
    %100 = math.tanh %99 : vector<8x128xf32>
    %101 = arith.subf %79, %100 : vector<8x128xf32>
    %102 = arith.mulf %94, %101 : vector<8x128xf32>
    %103 = arith.addf %100, %102 : vector<8x128xf32>
    %c3 = arith.constant 3 : index
    %c0_26 = arith.constant 0 : index
    %c0_27 = arith.constant 0 : index
    %104 = vector.load %arg6[%c3, %c0_26, %c0_27] : memref<8x8x128xf32, #tpu.memory_space<vmem>>, vector<1x8x128xf32>
    %105 = vector.shape_cast %104 : vector<1x8x128xf32> to vector<8x128xf32>
    %106 = vector.shape_cast %103 : vector<8x128xf32> to vector<1x8x128xf32>
    tpu.vector_store %arg6[%c3, %c0_26, %c0_27], %106 {strides = array<i32>} : memref<8x8x128xf32, #tpu.memory_space<vmem>>, vector<1x8x128xf32>,
    %107 = vector.extract_strided_slice %5 {offsets = [32, 0], sizes = [8, 384], strides = [1, 1]} : vector<64x384xf32> to vector<8x384xf32>
    %cst_28 = arith.constant dense<0.000000e+00> : vector<8x384xf32>
    %108 = tpu.matmul %103, %6, %cst_28 {dimension_numbers = #tpu.dot_dimension_numbers<[1], [0], [0], [1], [0, 0, 1, 1], [], []>} : vector<8x128xf32>, vector<128x384xf32>, vector<8x384xf32> -> vector<8x384xf32>
    %109 = vector.extract_strided_slice %107 {offsets = [0, 0], sizes = [8, 256], strides = [1, 1]} : vector<8x384xf32> to vector<8x256xf32>
    %110 = vector.extract_strided_slice %108 {offsets = [0, 0], sizes = [8, 256], strides = [1, 1]} : vector<8x384xf32> to vector<8x256xf32>
    %111 = arith.addf %109, %110 : vector<8x256xf32>
    %112 = arith.negf %111 : vector<8x256xf32>
    %113 = math.exp %112 : vector<8x256xf32>
    %cst_29 = arith.constant 1.000000e+00 : f32
    %114 = vector.broadcast %cst_29 : f32 to vector<8x256xf32>
    %115 = arith.addf %114, %113 : vector<8x256xf32>
    %116 = arith.divf %114, %115 : vector<8x256xf32>
    %117 = vector.extract_strided_slice %116 {offsets = [0, 0], sizes = [8, 128], strides = [1, 1]} : vector<8x256xf32> to vector<8x128xf32>
    %118 = vector.extract_strided_slice %116 {offsets = [0, 128], sizes = [8, 128], strides = [1, 1]} : vector<8x256xf32> to vector<8x128xf32>
    %119 = vector.extract_strided_slice %107 {offsets = [0, 256], sizes = [8, 128], strides = [1, 1]} : vector<8x384xf32> to vector<8x128xf32>
    %120 = vector.extract_strided_slice %108 {offsets = [0, 256], sizes = [8, 128], strides = [1, 1]} : vector<8x384xf32> to vector<8x128xf32>
    %121 = arith.addf %120, %9 : vector<8x128xf32>
    %122 = arith.mulf %117, %121 : vector<8x128xf32>
    %123 = arith.addf %119, %122 : vector<8x128xf32>
    %124 = math.tanh %123 : vector<8x128xf32>
    %125 = arith.subf %103, %124 : vector<8x128xf32>
    %126 = arith.mulf %118, %125 : vector<8x128xf32>
    %127 = arith.addf %124, %126 : vector<8x128xf32>
    %c4 = arith.constant 4 : index
    %c0_30 = arith.constant 0 : index
    %c0_31 = arith.constant 0 : index
    %128 = vector.load %arg6[%c4, %c0_30, %c0_31] : memref<8x8x128xf32, #tpu.memory_space<vmem>>, vector<1x8x128xf32>
    %129 = vector.shape_cast %128 : vector<1x8x128xf32> to vector<8x128xf32>
    %130 = vector.shape_cast %127 : vector<8x128xf32> to vector<1x8x128xf32>
    tpu.vector_store %arg6[%c4, %c0_30, %c0_31], %130 {strides = array<i32>} : memref<8x8x128xf32, #tpu.memory_space<vmem>>, vector<1x8x128xf32>,
    %131 = vector.extract_strided_slice %5 {offsets = [40, 0], sizes = [8, 384], strides = [1, 1]} : vector<64x384xf32> to vector<8x384xf32>
    %cst_32 = arith.constant dense<0.000000e+00> : vector<8x384xf32>
    %132 = tpu.matmul %127, %6, %cst_32 {dimension_numbers = #tpu.dot_dimension_numbers<[1], [0], [0], [1], [0, 0, 1, 1], [], []>} : vector<8x128xf32>, vector<128x384xf32>, vector<8x384xf32> -> vector<8x384xf32>
    %133 = vector.extract_strided_slice %131 {offsets = [0, 0], sizes = [8, 256], strides = [1, 1]} : vector<8x384xf32> to vector<8x256xf32>
    %134 = vector.extract_strided_slice %132 {offsets = [0, 0], sizes = [8, 256], strides = [1, 1]} : vector<8x384xf32> to vector<8x256xf32>
    %135 = arith.addf %133, %134 : vector<8x256xf32>
    %136 = arith.negf %135 : vector<8x256xf32>
    %137 = math.exp %136 : vector<8x256xf32>
    %cst_33 = arith.constant 1.000000e+00 : f32
    %138 = vector.broadcast %cst_33 : f32 to vector<8x256xf32>
    %139 = arith.addf %138, %137 : vector<8x256xf32>
    %140 = arith.divf %138, %139 : vector<8x256xf32>
    %141 = vector.extract_strided_slice %140 {offsets = [0, 0], sizes = [8, 128], strides = [1, 1]} : vector<8x256xf32> to vector<8x128xf32>
    %142 = vector.extract_strided_slice %140 {offsets = [0, 128], sizes = [8, 128], strides = [1, 1]} : vector<8x256xf32> to vector<8x128xf32>
    %143 = vector.extract_strided_slice %131 {offsets = [0, 256], sizes = [8, 128], strides = [1, 1]} : vector<8x384xf32> to vector<8x128xf32>
    %144 = vector.extract_strided_slice %132 {offsets = [0, 256], sizes = [8, 128], strides = [1, 1]} : vector<8x384xf32> to vector<8x128xf32>
    %145 = arith.addf %144, %9 : vector<8x128xf32>
    %146 = arith.mulf %141, %145 : vector<8x128xf32>
    %147 = arith.addf %143, %146 : vector<8x128xf32>
    %148 = math.tanh %147 : vector<8x128xf32>
    %149 = arith.subf %127, %148 : vector<8x128xf32>
    %150 = arith.mulf %142, %149 : vector<8x128xf32>
    %151 = arith.addf %148, %150 : vector<8x128xf32>
    %c5 = arith.constant 5 : index
    %c0_34 = arith.constant 0 : index
    %c0_35 = arith.constant 0 : index
    %152 = vector.load %arg6[%c5, %c0_34, %c0_35] : memref<8x8x128xf32, #tpu.memory_space<vmem>>, vector<1x8x128xf32>
    %153 = vector.shape_cast %152 : vector<1x8x128xf32> to vector<8x128xf32>
    %154 = vector.shape_cast %151 : vector<8x128xf32> to vector<1x8x128xf32>
    tpu.vector_store %arg6[%c5, %c0_34, %c0_35], %154 {strides = array<i32>} : memref<8x8x128xf32, #tpu.memory_space<vmem>>, vector<1x8x128xf32>,
    %155 = vector.extract_strided_slice %5 {offsets = [48, 0], sizes = [8, 384], strides = [1, 1]} : vector<64x384xf32> to vector<8x384xf32>
    %cst_36 = arith.constant dense<0.000000e+00> : vector<8x384xf32>
    %156 = tpu.matmul %151, %6, %cst_36 {dimension_numbers = #tpu.dot_dimension_numbers<[1], [0], [0], [1], [0, 0, 1, 1], [], []>} : vector<8x128xf32>, vector<128x384xf32>, vector<8x384xf32> -> vector<8x384xf32>
    %157 = vector.extract_strided_slice %155 {offsets = [0, 0], sizes = [8, 256], strides = [1, 1]} : vector<8x384xf32> to vector<8x256xf32>
    %158 = vector.extract_strided_slice %156 {offsets = [0, 0], sizes = [8, 256], strides = [1, 1]} : vector<8x384xf32> to vector<8x256xf32>
    %159 = arith.addf %157, %158 : vector<8x256xf32>
    %160 = arith.negf %159 : vector<8x256xf32>
    %161 = math.exp %160 : vector<8x256xf32>
    %cst_37 = arith.constant 1.000000e+00 : f32
    %162 = vector.broadcast %cst_37 : f32 to vector<8x256xf32>
    %163 = arith.addf %162, %161 : vector<8x256xf32>
    %164 = arith.divf %162, %163 : vector<8x256xf32>
    %165 = vector.extract_strided_slice %164 {offsets = [0, 0], sizes = [8, 128], strides = [1, 1]} : vector<8x256xf32> to vector<8x128xf32>
    %166 = vector.extract_strided_slice %164 {offsets = [0, 128], sizes = [8, 128], strides = [1, 1]} : vector<8x256xf32> to vector<8x128xf32>
    %167 = vector.extract_strided_slice %155 {offsets = [0, 256], sizes = [8, 128], strides = [1, 1]} : vector<8x384xf32> to vector<8x128xf32>
    %168 = vector.extract_strided_slice %156 {offsets = [0, 256], sizes = [8, 128], strides = [1, 1]} : vector<8x384xf32> to vector<8x128xf32>
    %169 = arith.addf %168, %9 : vector<8x128xf32>
    %170 = arith.mulf %165, %169 : vector<8x128xf32>
    %171 = arith.addf %167, %170 : vector<8x128xf32>
    %172 = math.tanh %171 : vector<8x128xf32>
    %173 = arith.subf %151, %172 : vector<8x128xf32>
    %174 = arith.mulf %166, %173 : vector<8x128xf32>
    %175 = arith.addf %172, %174 : vector<8x128xf32>
    %c6 = arith.constant 6 : index
    %c0_38 = arith.constant 0 : index
    %c0_39 = arith.constant 0 : index
    %176 = vector.load %arg6[%c6, %c0_38, %c0_39] : memref<8x8x128xf32, #tpu.memory_space<vmem>>, vector<1x8x128xf32>
    %177 = vector.shape_cast %176 : vector<1x8x128xf32> to vector<8x128xf32>
    %178 = vector.shape_cast %175 : vector<8x128xf32> to vector<1x8x128xf32>
    tpu.vector_store %arg6[%c6, %c0_38, %c0_39], %178 {strides = array<i32>} : memref<8x8x128xf32, #tpu.memory_space<vmem>>, vector<1x8x128xf32>,
    %179 = vector.extract_strided_slice %5 {offsets = [56, 0], sizes = [8, 384], strides = [1, 1]} : vector<64x384xf32> to vector<8x384xf32>
    %cst_40 = arith.constant dense<0.000000e+00> : vector<8x384xf32>
    %180 = tpu.matmul %175, %6, %cst_40 {dimension_numbers = #tpu.dot_dimension_numbers<[1], [0], [0], [1], [0, 0, 1, 1], [], []>} : vector<8x128xf32>, vector<128x384xf32>, vector<8x384xf32> -> vector<8x384xf32>
    %181 = vector.extract_strided_slice %179 {offsets = [0, 0], sizes = [8, 256], strides = [1, 1]} : vector<8x384xf32> to vector<8x256xf32>
    %182 = vector.extract_strided_slice %180 {offsets = [0, 0], sizes = [8, 256], strides = [1, 1]} : vector<8x384xf32> to vector<8x256xf32>
    %183 = arith.addf %181, %182 : vector<8x256xf32>
    %184 = arith.negf %183 : vector<8x256xf32>
    %185 = math.exp %184 : vector<8x256xf32>
    %cst_41 = arith.constant 1.000000e+00 : f32
    %186 = vector.broadcast %cst_41 : f32 to vector<8x256xf32>
    %187 = arith.addf %186, %185 : vector<8x256xf32>
    %188 = arith.divf %186, %187 : vector<8x256xf32>
    %189 = vector.extract_strided_slice %188 {offsets = [0, 0], sizes = [8, 128], strides = [1, 1]} : vector<8x256xf32> to vector<8x128xf32>
    %190 = vector.extract_strided_slice %188 {offsets = [0, 128], sizes = [8, 128], strides = [1, 1]} : vector<8x256xf32> to vector<8x128xf32>
    %191 = vector.extract_strided_slice %179 {offsets = [0, 256], sizes = [8, 128], strides = [1, 1]} : vector<8x384xf32> to vector<8x128xf32>
    %192 = vector.extract_strided_slice %180 {offsets = [0, 256], sizes = [8, 128], strides = [1, 1]} : vector<8x384xf32> to vector<8x128xf32>
    %193 = arith.addf %192, %9 : vector<8x128xf32>
    %194 = arith.mulf %189, %193 : vector<8x128xf32>
    %195 = arith.addf %191, %194 : vector<8x128xf32>
    %196 = math.tanh %195 : vector<8x128xf32>
    %197 = arith.subf %175, %196 : vector<8x128xf32>
    %198 = arith.mulf %190, %197 : vector<8x128xf32>
    %199 = arith.addf %196, %198 : vector<8x128xf32>
    %c7 = arith.constant 7 : index
    %c0_42 = arith.constant 0 : index
    %c0_43 = arith.constant 0 : index
    %200 = vector.load %arg6[%c7, %c0_42, %c0_43] : memref<8x8x128xf32, #tpu.memory_space<vmem>>, vector<1x8x128xf32>
    %201 = vector.shape_cast %200 : vector<1x8x128xf32> to vector<8x128xf32>
    %202 = vector.shape_cast %199 : vector<8x128xf32> to vector<1x8x128xf32>
    tpu.vector_store %arg6[%c7, %c0_42, %c0_43], %202 {strides = array<i32>} : memref<8x8x128xf32, #tpu.memory_space<vmem>>, vector<1x8x128xf32>,
    %c0_44 = arith.constant 0 : index
    %c0_45 = arith.constant 0 : index
    %203 = vector.load %arg7[%c0_44, %c0_45] : memref<8x128xf32, #tpu.memory_space<vmem>>, vector<8x128xf32>
    tpu.vector_store %arg7[%c0_44, %c0_45], %199 {strides = array<i32>} : memref<8x128xf32, #tpu.memory_space<vmem>>, vector<8x128xf32>,
    return
  }
}

</mosaic_0001>

<llo_original>
// kernel: gru_forward.1
$region0: #{gru_forward.1}
  #allocation0 [shape = 'u32[]', space=smem, size = 0x4, offset = 0x4, fixed_abs, tag = 'smem constant byte address 0x4 - core index']
  #allocation1 [shape = 'u32[144,128]{1,0:T(1,128)}', space=vmem, size = 0x12000, scoped, tag = 'internal scratch']
  %s0 = inlined_call_operand.vmem [shape: f32[64,16], index: 0, kind: input, shape index: {}]
  %s1 = inlined_call_operand.vmem [shape: f32[8,128], index: 1, kind: input, shape index: {}]
  %s2 = inlined_call_operand.vmem [shape: f32[16,384], index: 2, kind: input, shape index: {}]
  %s3 = inlined_call_operand.hbm [shape: f32[128,384], index: 3, kind: input, shape index: {}]
  %s4 = inlined_call_operand.vmem [shape: f32[1,384], index: 4, kind: input, shape index: {}]
  %s5 = inlined_call_operand.vmem [shape: f32[1,128], index: 5, kind: input, shape index: {}]
  %s6 = inlined_call_operand.vmem [shape: f32[8,8,128], index: 6, kind: output, shape index: {0}]
  %s7 = inlined_call_operand.vmem [shape: f32[8,128], index: 7, kind: output, shape index: {1}]
  %8 = xla_tuple %s6, %s7
  %s9 = sld [smem:[#allocation0]]
  $region46: #{gru_forward.1} parent=0
    _
  %s11 = ssub.s32 1, %s9
  %s12 = scalar_select 0, %s11, %s9
  $region1: #{gru_forward.1} parent=0
    #allocation2 [shape = 'u8[196608]{0}', space=vmem, size = 0x30000, scoped, tag = 'input window, operand 3, single buffered']
    #allocation3 [shape = 's32[1]{0}', space=sflag, size = 0x4, scoped, tag = 'scoped memory for gru_forward.1']
    %13 = vsyncpa [#allocation3], 0
    // Predicated region
    $region2: #{gru_forward.1} parent=1 // pred_check
      _
    $region3: #{gru_forward.1} parent=1 // pred_check_branch
      %15 = sbr.rel (0) target = $region5
    $region4: #{gru_forward.1} parent=1 // pred_region
      _
    $region5: #{gru_forward.1} parent=1 // pred_fallthru
      _
    // Predicated region
    $region6: #{gru_forward.1} parent=1 // pred_check
      _
    $region7: #{gru_forward.1} parent=1 // pred_check_branch
      %17 = sbr.rel (0) target = $region9
    $region8: #{gru_forward.1} parent=1 // pred_region
      _
    $region9: #{gru_forward.1} parent=1 // pred_fallthru
      _
    // Predicated region
    $region10: #{gru_forward.1} parent=1 // pred_check
      _
    $region11: #{gru_forward.1} parent=1 // pred_check_branch
      %19 = sbr.rel (0) target = $region13
    $region12: #{gru_forward.1} parent=1 // pred_region
      _
    $region13: #{gru_forward.1} parent=1 // pred_fallthru
      _
    // Predicated region
    $region14: #{gru_forward.1} parent=1 // pred_check
      _
    $region15: #{gru_forward.1} parent=1 // pred_check_branch
      %21 = sbr.rel (0) target = $region17
    $region16: #{gru_forward.1} parent=1 // pred_region
      %s23 = ssub.s32 6144, 6144
      %24 = vsyncadd [#allocation3], %s23
      %s25 = sshll.u32 [#allocation2], 4
      %s26 = int_to_ptr.vmem [resolvable:$true] %s25
      %31 = dma.hbm_to_vmem [thread:$0]  %s3, 6144, %s26, [#allocation3], 384, 384, 24
    $region17: #{gru_forward.1} parent=1 // pred_fallthru
      _
    // Predicated region
    $region18: #{gru_forward.1} parent=1 // pred_check
      _
    $region19: #{gru_forward.1} parent=1 // pred_check_branch
      %33 = sbr.rel (0) target = $region21
    $region20: #{gru_forward.1} parent=1 // pred_region
      _
    $region21: #{gru_forward.1} parent=1 // pred_fallthru
      _
    // Predicated region
    $region22: #{gru_forward.1} parent=1 // pred_check
      _
    $region23: #{gru_forward.1} parent=1 // pred_check_branch
      %35 = sbr.rel (0) target = $region25
    $region24: #{gru_forward.1} parent=1 // pred_region
      _
    $region25: #{gru_forward.1} parent=1 // pred_fallthru
      _
    // Predicated region
    $region26: #{gru_forward.1} parent=1 // pred_check
      _
    $region27: #{gru_forward.1} parent=1 // pred_check_branch
      %37 = sbr.rel (0) target = $region29
    $region28: #{gru_forward.1} parent=1 // pred_region
      %38 = dma.done [#allocation3], 6144
    $region29: #{gru_forward.1} parent=1 // pred_fallthru
      _
    %v39 = vld [vmem:[%s0] sm:$0xff]
    %v40 = vld [vmem:[%s0 + $0x8] sm:$0xff]
    %v41 = vld [vmem:[%s0 + $0x10] sm:$0xff]
    %v42 = vld [vmem:[%s0 + $0x18] sm:$0xff]
    %v43 = vld [vmem:[%s0 + $0x20] sm:$0xff]
    %v44 = vld [vmem:[%s0 + $0x28] sm:$0xff]
    %v45 = vld [vmem:[%s0 + $0x30] sm:$0xff]
    %v46 = vld [vmem:[%s0 + $0x38] sm:$0xff]
    %v47 = vld [vmem:[%s2] sm:$0xff]
    %v48 = vld [vmem:[%s2 + $0x8] sm:$0xff]
    %v49 = vld [vmem:[%s2 + $0x10] sm:$0xff]
    %v50 = vld [vmem:[%s2 + $0x18] sm:$0xff]
    %v51 = vld [vmem:[%s2 + $0x20] sm:$0xff]
    %v52 = vld [vmem:[%s2 + $0x28] sm:$0xff]
    %v53 = vld [vmem:[%s4] sm:$0x7]
    %v55 = vlaneseq
    %v56 = vshrl.u32 %v55, 7
    %v57 = vsub.s32 0, %v56
    %v58 = vrot.slane %v53, %v57
    %v59 = vlaneseq
    %v60 = vshrl.u32 %v59, 7
    %v61 = vsub.s32 1, %v60
    %v62 = vrot.slane %v53, %v61
    %v63 = vlaneseq
    %v64 = vshrl.u32 %v63, 7
    %v65 = vsub.s32 2, %v64
    %v66 = vrot.slane %v53, %v65
    %vm70 = vcmask 130048
    %v72 = vsel %vm70, %v39, 0
    %v75 = vsel %vm70, %v40, 0
    %v78 = vsel %vm70, %v41, 0
    %v81 = vsel %vm70, %v42, 0
    %v84 = vsel %vm70, %v43, 0
    %v87 = vsel %vm70, %v44, 0
    %v90 = vsel %vm70, %v45, 0
    %v93 = vsel %vm70, %v46, 0
    %95 = vmatprep.subr.mxu0 0.0
    %96 = vmatpush1.msra.mxu0 0.0
    %97 = vmatprep.subr.mxu0 0.0
    %98 = vmatpush1.msra.mxu0 0.0
    %99 = vmatprep.subr.mxu0 0.0
    %100 = vmatpush1.msra.mxu0 0.0
    %101 = vmatprep.subr.mxu0 0.0
    %102 = vmatpush1.msra.mxu0 0.0
    %103 = vmatprep.subr.mxu0 0.0
    %104 = vmatpush1.msra.mxu0 0.0
    %105 = vmatprep.subr.mxu0 0.0
    %106 = vmatpush1.msra.mxu0 0.0
    %107 = vmatprep.subr.mxu0 0.0
    %108 = vmatpush1.msra.mxu0 0.0
    %109 = vmatprep.subr.mxu0 0.0
    %110 = vmatpush1.msra.mxu0 0.0
    %111 = vmatprep.subr.mxu0 0.0
    %112 = vmatpush1.msra.mxu0 0.0
    %113 = vmatprep.subr.mxu0 0.0
    %114 = vmatpush1.msra.mxu0 0.0
    %115 = vmatprep.subr.mxu0 0.0
    %116 = vmatpush1.msra.mxu0 0.0
    %117 = vmatprep.subr.mxu0 0.0
    %118 = vmatpush1.msra.mxu0 0.0
    %119 = vmatprep.subr.mxu0 0.0
    %120 = vmatpush1.msra.mxu0 0.0
    %121 = vmatprep.subr.mxu0 0.0
    %122 = vmatpush1.msra.mxu0 0.0
    %123 = vmatprep.subr.mxu0 %v51
    %124 = vmatpush1.msra.mxu0 %v50
    %125 = vmatprep.subr.mxu0 %v48
    %126 = vmatpush1.msra.mxu0 %v47
    %127 = vmatprep.subr.mxu0 0.0
    %128 = vmatpush2.msra.mxu0 0.0
    %129 = vmatprep.subr.mxu0 0.0
    %130 = vmatpush2.msra.mxu0 0.0
    %131 = vmatprep.subr.mxu0 0.0
    %132 = vmatpush2.msra.mxu0 0.0
    %133 = vmatprep.subr.mxu0 0.0
    %134 = vmatpush2.msra.mxu0 0.0
    %135 = vmatprep.subr.mxu0 0.0
    %136 = vmatpush2.msra.mxu0 0.0
    %137 = vmatprep.subr.mxu0 0.0
    %138 = vmatpush2.msra.mxu0 0.0
    %139 = vmatprep.subr.mxu0 0.0
    %140 = vmatpush2.msra.mxu0 0.0
    %141 = vmatprep.subr.mxu0 0.0
    %142 = vmatpush2.msra.mxu0 0.0
    %143 = vmatprep.subr.mxu0 0.0
    %144 = vmatpush2.msra.mxu0 0.0
    %145 = vmatprep.subr.mxu0 0.0
    %146 = vmatpush2.msra.mxu0 0.0
    %147 = vmatprep.subr.mxu0 0.0
    %148 = vmatpush2.msra.mxu0 0.0
    %149 = vmatprep.subr.mxu0 0.0
    %150 = vmatpush2.msra.mxu0 0.0
    %151 = vmatprep.subr.mxu0 0.0
    %152 = vmatpush2.msra.mxu0 0.0
    %153 = vmatprep.subr.mxu0 0.0
    %154 = vmatpush2.msra.mxu0 0.0
    %155 = vmatprep.subr.mxu0 0.0
    %156 = vmatpush2.msra.mxu0 0.0
    %157 = vmatprep.subr.mxu0 0.0
    %158 = vmatpush2.msra.mxu0 0.0
    %159 = vmatprep.mubr.f32.mxu0 0.0
    %160 = vmatmul.mubr.f32.gmra.mxu0 %v72
    %v161 = vpop.f32.mrf.mxu0
    %v162 = vadd.f32 %v58, %v161
    %v163 = vpop.f32.mrf.mxu0
    %v164 = vadd.f32 %v62, %v163
    %165 = vmatprep.mubr.f32.mxu0 0.0
    %166 = vmatmul.mubr.f32.gmra.mxu0 %v75
    %v167 = vpop.f32.mrf.mxu0
    %v168 = vadd.f32 %v58, %v167
    %v169 = vpop.f32.mrf.mxu0
    %v170 = vadd.f32 %v62, %v169
    %171 = vmatprep.mubr.f32.mxu0 0.0
    %172 = vmatmul.mubr.f32.gmra.mxu0 %v78
    %v173 = vpop.f32.mrf.mxu0
    %v174 = vadd.f32 %v58, %v173
    %v175 = vpop.f32.mrf.mxu0
    %v176 = vadd.f32 %v62, %v175
    %177 = vmatprep.mubr.f32.mxu0 0.0
    %178 = vmatmul.mubr.f32.gmra.mxu0 %v81
    %v179 = vpop.f32.mrf.mxu0
    %v180 = vadd.f32 %v58, %v179
    %v181 = vpop.f32.mrf.mxu0
    %v182 = vadd.f32 %v62, %v181
    %183 = vmatprep.mubr.f32.mxu0 0.0
    %184 = vmatmul.mubr.f32.gmra.mxu0 %v84
    %v185 = vpop.f32.mrf.mxu0
    %v186 = vadd.f32 %v58, %v185
    %v187 = vpop.f32.mrf.mxu0
    %v188 = vadd.f32 %v62, %v187
    %189 = vmatprep.mubr.f32.mxu0 0.0
    %190 = vmatmul.mubr.f32.gmra.mxu0 %v87
    %v191 = vpop.f32.mrf.mxu0
    %v192 = vadd.f32 %v58, %v191
    %v193 = vpop.f32.mrf.mxu0
    %v194 = vadd.f32 %v62, %v193
    %195 = vmatprep.mubr.f32.mxu0 0.0
    %196 = vmatmul.mubr.f32.gmra.mxu0 %v90
    %v197 = vpop.f32.mrf.mxu0
    %v198 = vadd.f32 %v58, %v197
    %v199 = vpop.f32.mrf.mxu0
    %v200 = vadd.f32 %v62, %v199
    %201 = vmatprep.mubr.f32.mxu0 0.0
    %202 = vmatmul.mubr.f32.gmra.mxu0 %v93
    %v203 = vpop.f32.mrf.mxu0
    %v204 = vadd.f32 %v58, %v203
    %v205 = vpop.f32.mrf.mxu0
    %v206 = vadd.f32 %v62, %v205
    %207 = vdwg.mxu0
    %208 = vmatprep.subr.mxu0 0.0
    %209 = vmatpush1.msra.mxu0 0.0
    %210 = vmatprep.subr.mxu0 0.0
    %211 = vmatpush1.msra.mxu0 0.0
    %212 = vmatprep.subr.mxu0 0.0
    %213 = vmatpush1.msra.mxu0 0.0
    %214 = vmatprep.subr.mxu0 0.0
    %215 = vmatpush1.msra.mxu0 0.0
    %216 = vmatprep.subr.mxu0 0.0
    %217 = vmatpush1.msra.mxu0 0.0
    %218 = vmatprep.subr.mxu0 0.0
    %219 = vmatpush1.msra.mxu0 0.0
    %220 = vmatprep.subr.mxu0 0.0
    %221 = vmatpush1.msra.mxu0 0.0
    %222 = vmatprep.subr.mxu0 0.0
    %223 = vmatpush1.msra.mxu0 0.0
    %224 = vmatprep.subr.mxu0 0.0
    %225 = vmatpush1.msra.mxu0 0.0
    %226 = vmatprep.subr.mxu0 0.0
    %227 = vmatpush1.msra.mxu0 0.0
    %228 = vmatprep.subr.mxu0 0.0
    %229 = vmatpush1.msra.mxu0 0.0
    %230 = vmatprep.subr.mxu0 0.0
    %231 = vmatpush1.msra.mxu0 0.0
    %232 = vmatprep.subr.mxu0 0.0
    %233 = vmatpush1.msra.mxu0 0.0
    %234 = vmatprep.subr.mxu0 0.0
    %235 = vmatpush1.msra.mxu0 0.0
    %236 = vmatprep.subr.mxu0 0.0
    %237 = vmatpush1.msra.mxu0 %v52
    %238 = vmatprep.subr.mxu0 0.0
    %239 = vmatpush1.msra.mxu0 %v49
    %240 = vmatprep.subr.mxu0 0.0
    %241 = vmatpush2.msra.mxu0 0.0
    %242 = vmatprep.subr.mxu0 0.0
    %243 = vmatpush2.msra.mxu0 0.0
    %244 = vmatprep.subr.mxu0 0.0
    %245 = vmatpush2.msra.mxu0 0.0
    %246 = vmatprep.subr.mxu0 0.0
    %247 = vmatpush2.msra.mxu0 0.0
    %248 = vmatprep.subr.mxu0 0.0
    %249 = vmatpush2.msra.mxu0 0.0
    %250 = vmatprep.subr.mxu0 0.0
    %251 = vmatpush2.msra.mxu0 0.0
    %252 = vmatprep.subr.mxu0 0.0
    %253 = vmatpush2.msra.mxu0 0.0
    %254 = vmatprep.subr.mxu0 0.0
    %255 = vmatpush2.msra.mxu0 0.0
    %256 = vmatprep.subr.mxu0 0.0
    %257 = vmatpush2.msra.mxu0 0.0
    %258 = vmatprep.subr.mxu0 0.0
    %259 = vmatpush2.msra.mxu0 0.0
    %260 = vmatprep.subr.mxu0 0.0
    %261 = vmatpush2.msra.mxu0 0.0
    %262 = vmatprep.subr.mxu0 0.0
    %263 = vmatpush2.msra.mxu0 0.0
    %264 = vmatprep.subr.mxu0 0.0
    %265 = vmatpush2.msra.mxu0 0.0
    %266 = vmatprep.subr.mxu0 0.0
    %267 = vmatpush2.msra.mxu0 0.0
    %268 = vmatprep.subr.mxu0 0.0
    %269 = vmatpush2.msra.mxu0 0.0
    %270 = vmatprep.subr.mxu0 0.0
    %271 = vmatpush2.msra.mxu0 0.0
    %272 = vmatprep.mubr.f32.mxu0 0.0
    %273 = vmatmul.mubr.f32.gmra.mxu0 %v72
    %v274 = vpop.f32.mrf.mxu0
    %v275 = vadd.f32 %v66, %v274
    %v276 = vpop.f32.mrf.mxu0
    %277 = vmatprep.mubr.f32.mxu0 0.0
    %278 = vmatmul.mubr.f32.gmra.mxu0 %v75
    %v279 = vpop.f32.mrf.mxu0
    %v280 = vadd.f32 %v66, %v279
    %v281 = vpop.f32.mrf.mxu0
    %282 = vmatprep.mubr.f32.mxu0 0.0
    %283 = vmatmul.mubr.f32.gmra.mxu0 %v78
    %v284 = vpop.f32.mrf.mxu0
    %v285 = vadd.f32 %v66, %v284
    %v286 = vpop.f32.mrf.mxu0
    %287 = vmatprep.mubr.f32.mxu0 0.0
    %288 = vmatmul.mubr.f32.gmra.mxu0 %v81
    %v289 = vpop.f32.mrf.mxu0
    %v290 = vadd.f32 %v66, %v289
    %v291 = vpop.f32.mrf.mxu0
    %292 = vmatprep.mubr.f32.mxu0 0.0
    %293 = vmatmul.mubr.f32.gmra.mxu0 %v84
    %v294 = vpop.f32.mrf.mxu0
    %v295 = vadd.f32 %v66, %v294
    %v296 = vpop.f32.mrf.mxu0
    %297 = vmatprep.mubr.f32.mxu0 0.0
    %298 = vmatmul.mubr.f32.gmra.mxu0 %v87
    %v299 = vpop.f32.mrf.mxu0
    %v300 = vadd.f32 %v66, %v299
    %v301 = vpop.f32.mrf.mxu0
    %302 = vmatprep.mubr.f32.mxu0 0.0
    %303 = vmatmul.mubr.f32.gmra.mxu0 %v90
    %v304 = vpop.f32.mrf.mxu0
    %v305 = vadd.f32 %v66, %v304
    %v306 = vpop.f32.mrf.mxu0
    %307 = vmatprep.mubr.f32.mxu0 0.0
    %308 = vmatmul.mubr.f32.gmra.mxu0 %v93
    %v309 = vpop.f32.mrf.mxu0
    %v310 = vadd.f32 %v66, %v309
    %v311 = vpop.f32.mrf.mxu0
    %312 = vdwg.mxu0
    %v313 = vld [vmem:[#allocation2] sm:$0xff]
    %v314 = vld [vmem:[#allocation2 + $0x8] sm:$0xff]
    %v315 = vld [vmem:[#allocation2 + $0x10] sm:$0xff]
    %v316 = vld [vmem:[#allocation2 + $0x18] sm:$0xff]
    %v317 = vld [vmem:[#allocation2 + $0x20] sm:$0xff]
    %v318 = vld [vmem:[#allocation2 + $0x28] sm:$0xff]
    %v319 = vld [vmem:[#allocation2 + $0x30] sm:$0xff]
    %v320 = vld [vmem:[#allocation2 + $0x38] sm:$0xff]
    %v321 = vld [vmem:[#allocation2 + $0x40] sm:$0xff]
    %v322 = vld [vmem:[#allocation2 + $0x48] sm:$0xff]
    %v323 = vld [vmem:[#allocation2 + $0x50] sm:$0xff]
    %v324 = vld [vmem:[#allocation2 + $0x58] sm:$0xff]
    %v325 = vld [vmem:[#allocation2 + $0x60] sm:$0xff]
    %v326 = vld [vmem:[#allocation2 + $0x68] sm:$0xff]
    %v327 = vld [vmem:[#allocation2 + $0x70] sm:$0xff]
    %v328 = vld [vmem:[#allocation2 + $0x78] sm:$0xff]
    %v329 = vld [vmem:[#allocation2 + $0x80] sm:$0xff]
    %v330 = vld [vmem:[#allocation2 + $0x88] sm:$0xff]
    %v331 = vld [vmem:[#allocation2 + $0x90] sm:$0xff]
    %v332 = vld [vmem:[#allocation2 + $0x98] sm:$0xff]
    %v333 = vld [vmem:[#allocation2 + $0xa0] sm:$0xff]
    %v334 = vld [vmem:[#allocation2 + $0xa8] sm:$0xff]
    %v335 = vld [vmem:[#allocation2 + $0xb0] sm:$0xff]
    %v336 = vld [vmem:[#allocation2 + $0xb8] sm:$0xff]
    %v337 = vld [vmem:[#allocation2 + $0xc0] sm:$0xff]
    %v338 = vld [vmem:[#allocation2 + $0xc8] sm:$0xff]
    %v339 = vld [vmem:[#allocation2 + $0xd0] sm:$0xff]
    %v340 = vld [vmem:[#allocation2 + $0xd8] sm:$0xff]
    %v341 = vld [vmem:[#allocation2 + $0xe0] sm:$0xff]
    %v342 = vld [vmem:[#allocation2 + $0xe8] sm:$0xff]
    %v343 = vld [vmem:[#allocation2 + $0xf0] sm:$0xff]
    %v344 = vld [vmem:[#allocation2 + $0xf8] sm:$0xff]
    %v345 = vld [vmem:[#allocation2 + $0x100] sm:$0xff]
    %v346 = vld [vmem:[#allocation2 + $0x108] sm:$0xff]
    %v347 = vld [vmem:[#allocation2 + $0x110] sm:$0xff]
    %v348 = vld [vmem:[#allocation2 + $0x118] sm:$0xff]
    %v349 = vld [vmem:[#allocation2 + $0x120] sm:$0xff]
    %v350 = vld [vmem:[#allocation2 + $0x128] sm:$0xff]
    %v351 = vld [vmem:[#allocation2 + $0x130] sm:$0xff]
    %v352 = vld [vmem:[#allocation2 + $0x138] sm:$0xff]
    %v353 = vld [vmem:[#allocation2 + $0x140] sm:$0xff]
    %v354 = vld [vmem:[#allocation2 + $0x148] sm:$0xff]
    %v355 = vld [vmem:[#allocation2 + $0x150] sm:$0xff]
    %v356 = vld [vmem:[#allocation2 + $0x158] sm:$0xff]
    %v357 = vld [vmem:[#allocation2 + $0x160] sm:$0xff]
    %v358 = vld [vmem:[#allocation2 + $0x168] sm:$0xff]
    %v359 = vld [vmem:[#allocation2 + $0x170] sm:$0xff]
    %v360 = vld [vmem:[#allocation2 + $0x178] sm:$0xff]
    %v361 = vld [vmem:[%s5] sm:$0x1]
    %v363 = vlaneseq
    %v364 = vshrl.u32 %v363, 7
    %v365 = vsub.s32 0, %v364
    %v366 = vrot.slane %v361, %v365
    %v368 = vld [vmem:[%s1] sm:$0xff]
    %369 = vmatprep.subr.mxu0 %v359
    %370 = vmatpush1.msra.mxu0 %v358
    %371 = vmatprep.subr.mxu0 %v356
    %372 = vmatpush1.msra.mxu0 %v355
    %373 = vmatprep.subr.mxu0 %v353
    %374 = vmatpush1.msra.mxu0 %v352
    %375 = vmatprep.subr.mxu0 %v350
    %376 = vmatpush1.msra.mxu0 %v349
    %377 = vmatprep.subr.mxu0 %v347
    %378 = vmatpush1.msra.mxu0 %v346
    %379 = vmatprep.subr.mxu0 %v344
    %380 = vmatpush1.msra.mxu0 %v343
    %381 = vmatprep.subr.mxu0 %v341
    %382 = vmatpush1.msra.mxu0 %v340
    %383 = vmatprep.subr.mxu0 %v338
    %384 = vmatpush1.msra.mxu0 %v337
    %385 = vmatprep.subr.mxu0 %v335
    %386 = vmatpush1.msra.mxu0 %v334
    %387 = vmatprep.subr.mxu0 %v332
    %388 = vmatpush1.msra.mxu0 %v331
    %389 = vmatprep.subr.mxu0 %v329
    %390 = vmatpush1.msra.mxu0 %v328
    %391 = vmatprep.subr.mxu0 %v326
    %392 = vmatpush1.msra.mxu0 %v325
    %393 = vmatprep.subr.mxu0 %v323
    %394 = vmatpush1.msra.mxu0 %v322
    %395 = vmatprep.subr.mxu0 %v320
    %396 = vmatpush1.msra.mxu0 %v319
    %397 = vmatprep.subr.mxu0 %v317
    %398 = vmatpush1.msra.mxu0 %v316
    %399 = vmatprep.subr.mxu0 %v314
    %400 = vmatpush1.msra.mxu0 %v313
    %401 = vmatprep.subr.mxu0 0.0
    %402 = vmatpush2.msra.mxu0 0.0
    %403 = vmatprep.subr.mxu0 0.0
    %404 = vmatpush2.msra.mxu0 0.0
    %405 = vmatprep.subr.mxu0 0.0
    %406 = vmatpush2.msra.mxu0 0.0
    %407 = vmatprep.subr.mxu0 0.0
    %408 = vmatpush2.msra.mxu0 0.0
    %409 = vmatprep.subr.mxu0 0.0
    %410 = vmatpush2.msra.mxu0 0.0
    %411 = vmatprep.subr.mxu0 0.0
    %412 = vmatpush2.msra.mxu0 0.0
    %413 = vmatprep.subr.mxu0 0.0
    %414 = vmatpush2.msra.mxu0 0.0
    %415 = vmatprep.subr.mxu0 0.0
    %416 = vmatpush2.msra.mxu0 0.0
    %417 = vmatprep.subr.mxu0 0.0
    %418 = vmatpush2.msra.mxu0 0.0
    %419 = vmatprep.subr.mxu0 0.0
    %420 = vmatpush2.msra.mxu0 0.0
    %421 = vmatprep.subr.mxu0 0.0
    %422 = vmatpush2.msra.mxu0 0.0
    %423 = vmatprep.subr.mxu0 0.0
    %424 = vmatpush2.msra.mxu0 0.0
    %425 = vmatprep.subr.mxu0 0.0
    %426 = vmatpush2.msra.mxu0 0.0
    %427 = vmatprep.subr.mxu0 0.0
    %428 = vmatpush2.msra.mxu0 0.0
    %429 = vmatprep.subr.mxu0 0.0
    %430 = vmatpush2.msra.mxu0 0.0
    %431 = vmatprep.subr.mxu0 0.0
    %432 = vmatpush2.msra.mxu0 0.0
    %433 = vmatprep.mubr.f32.mxu0 0.0
    %434 = vmatmul.mubr.f32.gmra.mxu0 %v368
    %v435 = vpop.f32.mrf.mxu0
    %v436 = vadd.f32 0.0, %v435
    %v437 = vpop.f32.mrf.mxu0
    %v438 = vadd.f32 0.0, %v437
    %439 = vdwg.mxu0
    %440 = vmatprep.subr.mxu0 0.0
    %441 = vmatpush1.msra.mxu0 %v360
    %442 = vmatprep.subr.mxu0 0.0
    %443 = vmatpush1.msra.mxu0 %v357
    %444 = vmatprep.subr.mxu0 0.0
    %445 = vmatpush1.msra.mxu0 %v354
    %446 = vmatprep.subr.mxu0 0.0
    %447 = vmatpush1.msra.mxu0 %v351
    %448 = vmatprep.subr.mxu0 0.0
    %449 = vmatpush1.msra.mxu0 %v348
    %450 = vmatprep.subr.mxu0 0.0
    %451 = vmatpush1.msra.mxu0 %v345
    %452 = vmatprep.subr.mxu0 0.0
    %453 = vmatpush1.msra.mxu0 %v342
    %454 = vmatprep.subr.mxu0 0.0
    %455 = vmatpush1.msra.mxu0 %v339
    %456 = vmatprep.subr.mxu0 0.0
    %457 = vmatpush1.msra.mxu0 %v336
    %458 = vmatprep.subr.mxu0 0.0
    %459 = vmatpush1.msra.mxu0 %v333
    %460 = vmatprep.subr.mxu0 0.0
    %461 = vmatpush1.msra.mxu0 %v330
    %462 = vmatprep.subr.mxu0 0.0
    %463 = vmatpush1.msra.mxu0 %v327
    %464 = vmatprep.subr.mxu0 0.0
    %465 = vmatpush1.msra.mxu0 %v324
    %466 = vmatprep.subr.mxu0 0.0
    %467 = vmatpush1.msra.mxu0 %v321
    %468 = vmatprep.subr.mxu0 0.0
    %469 = vmatpush1.msra.mxu0 %v318
    %470 = vmatprep.subr.mxu0 0.0
    %471 = vmatpush1.msra.mxu0 %v315
    %472 = vmatprep.subr.mxu0 0.0
    %473 = vmatpush2.msra.mxu0 0.0
    %474 = vmatprep.subr.mxu0 0.0
    %475 = vmatpush2.msra.mxu0 0.0
    %476 = vmatprep.subr.mxu0 0.0
    %477 = vmatpush2.msra.mxu0 0.0
    %478 = vmatprep.subr.mxu0 0.0
    %479 = vmatpush2.msra.mxu0 0.0
    %480 = vmatprep.subr.mxu0 0.0
    %481 = vmatpush2.msra.mxu0 0.0
    %482 = vmatprep.subr.mxu0 0.0
    %483 = vmatpush2.msra.mxu0 0.0
    %484 = vmatprep.subr.mxu0 0.0
    %485 = vmatpush2.msra.mxu0 0.0
    %486 = vmatprep.subr.mxu0 0.0
    %487 = vmatpush2.msra.mxu0 0.0
    %488 = vmatprep.subr.mxu0 0.0
    %489 = vmatpush2.msra.mxu0 0.0
    %490 = vmatprep.subr.mxu0 0.0
    %491 = vmatpush2.msra.mxu0 0.0
    %492 = vmatprep.subr.mxu0 0.0
    %493 = vmatpush2.msra.mxu0 0.0
    %494 = vmatprep.subr.mxu0 0.0
    %495 = vmatpush2.msra.mxu0 0.0
    %496 = vmatprep.subr.mxu0 0.0
    %497 = vmatpush2.msra.mxu0 0.0
    %498 = vmatprep.subr.mxu0 0.0
    %499 = vmatpush2.msra.mxu0 0.0
    %500 = vmatprep.subr.mxu0 0.0
    %501 = vmatpush2.msra.mxu0 0.0
    %502 = vmatprep.subr.mxu0 0.0
    %503 = vmatpush2.msra.mxu0 0.0
    %504 = vmatprep.mubr.f32.mxu0 0.0
    %505 = vmatmul.mubr.f32.gmra.mxu0 %v368
    %v506 = vpop.f32.mrf.mxu0
    %v507 = vadd.f32 0.0, %v506
    %v508 = vpop.f32.mrf.mxu0
    %509 = vdwg.mxu0
    %v510 = vadd.f32 %v162, %v436
    %v511 = vadd.f32 %v164, %v438
    %v512 = vxor.u32 %v510, 2147483648
    %v513 = vxor.u32 %v511, 2147483648
    %v514 = vmul.f32 %v512, 1.442695
    %v515 = vpow.pop %v514
    %v516 = vmul.f32 %v513, 1.442695
    %v517 = vpow.pop %v516
    %v518 = vadd.f32 %v515, 1.0
    %v519 = vadd.f32 %v517, 1.0
    %v520 = vrcp.pop %v518
    %v521 = vmul.f32 1.0, %v520
    %v522 = vrcp.pop %v519
    %v523 = vmul.f32 1.0, %v522
    %v524 = vadd.f32 %v507, %v366
    %v525 = vmul.f32 %v521, %v524
    %v526 = vadd.f32 %v275, %v525
    %v527 = vtanh.pop %v526
    %v528 = vsub.f32 %v368, %v527
    %v529 = vmul.f32 %v523, %v528
    %v530 = vadd.f32 %v527, %v529
    %531 = vst [vmem:[%s6] sm:$0xff] %v530
    %532 = vmatprep.subr.mxu0 %v359
    %533 = vmatpush1.msra.mxu0 %v358
    %534 = vmatprep.subr.mxu0 %v356
    %535 = vmatpush1.msra.mxu0 %v355
    %536 = vmatprep.subr.mxu0 %v353
    %537 = vmatpush1.msra.mxu0 %v352
    %538 = vmatprep.subr.mxu0 %v350
    %539 = vmatpush1.msra.mxu0 %v349
    %540 = vmatprep.subr.mxu0 %v347
    %541 = vmatpush1.msra.mxu0 %v346
    %542 = vmatprep.subr.mxu0 %v344
    %543 = vmatpush1.msra.mxu0 %v343
    %544 = vmatprep.subr.mxu0 %v341
    %545 = vmatpush1.msra.mxu0 %v340
    %546 = vmatprep.subr.mxu0 %v338
    %547 = vmatpush1.msra.mxu0 %v337
    %548 = vmatprep.subr.mxu0 %v335
    %549 = vmatpush1.msra.mxu0 %v334
    %550 = vmatprep.subr.mxu0 %v332
    %551 = vmatpush1.msra.mxu0 %v331
    %552 = vmatprep.subr.mxu0 %v329
    %553 = vmatpush1.msra.mxu0 %v328
    %554 = vmatprep.subr.mxu0 %v326
    %555 = vmatpush1.msra.mxu0 %v325
    %556 = vmatprep.subr.mxu0 %v323
    %557 = vmatpush1.msra.mxu0 %v322
    %558 = vmatprep.subr.mxu0 %v320
    %559 = vmatpush1.msra.mxu0 %v319
    %560 = vmatprep.subr.mxu0 %v317
    %561 = vmatpush1.msra.mxu0 %v316
    %562 = vmatprep.subr.mxu0 %v314
    %563 = vmatpush1.msra.mxu0 %v313
    %564 = vmatprep.subr.mxu0 0.0
    %565 = vmatpush2.msra.mxu0 0.0
    %566 = vmatprep.subr.mxu0 0.0
    %567 = vmatpush2.msra.mxu0 0.0
    %568 = vmatprep.subr.mxu0 0.0
    %569 = vmatpush2.msra.mxu0 0.0
    %570 = vmatprep.subr.mxu0 0.0
    %571 = vmatpush2.msra.mxu0 0.0
    %572 = vmatprep.subr.mxu0 0.0
    %573 = vmatpush2.msra.mxu0 0.0
    %574 = vmatprep.subr.mxu0 0.0
    %575 = vmatpush2.msra.mxu0 0.0
    %576 = vmatprep.subr.mxu0 0.0
    %577 = vmatpush2.msra.mxu0 0.0
    %578 = vmatprep.subr.mxu0 0.0
    %579 = vmatpush2.msra.mxu0 0.0
    %580 = vmatprep.subr.mxu0 0.0
    %581 = vmatpush2.msra.mxu0 0.0
    %582 = vmatprep.subr.mxu0 0.0
    %583 = vmatpush2.msra.mxu0 0.0
    %584 = vmatprep.subr.mxu0 0.0
    %585 = vmatpush2.msra.mxu0 0.0
    %586 = vmatprep.subr.mxu0 0.0
    %587 = vmatpush2.msra.mxu0 0.0
    %588 = vmatprep.subr.mxu0 0.0
    %589 = vmatpush2.msra.mxu0 0.0
    %590 = vmatprep.subr.mxu0 0.0
    %591 = vmatpush2.msra.mxu0 0.0
    %592 = vmatprep.subr.mxu0 0.0
    %593 = vmatpush2.msra.mxu0 0.0
    %594 = vmatprep.subr.mxu0 0.0
    %595 = vmatpush2.msra.mxu0 0.0
    %596 = vmatprep.mubr.f32.mxu0 0.0
    %597 = vmatmul.mubr.f32.gmra.mxu0 %v530
    %v598 = vpop.f32.mrf.mxu0
    %v599 = vadd.f32 0.0, %v598
    %v600 = vpop.f32.mrf.mxu0
    %v601 = vadd.f32 0.0, %v600
    %602 = vdwg.mxu0
    %603 = vmatprep.subr.mxu0 0.0
    %604 = vmatpush1.msra.mxu0 %v360
    %605 = vmatprep.subr.mxu0 0.0
    %606 = vmatpush1.msra.mxu0 %v357
    %607 = vmatprep.subr.mxu0 0.0
    %608 = vmatpush1.msra.mxu0 %v354
    %609 = vmatprep.subr.mxu0 0.0
    %610 = vmatpush1.msra.mxu0 %v351
    %611 = vmatprep.subr.mxu0 0.0
    %612 = vmatpush1.msra.mxu0 %v348
    %613 = vmatprep.subr.mxu0 0.0
    %614 = vmatpush1.msra.mxu0 %v345
    %615 = vmatprep.subr.mxu0 0.0
    %616 = vmatpush1.msra.mxu0 %v342
    %617 = vmatprep.subr.mxu0 0.0
    %618 = vmatpush1.msra.mxu0 %v339
    %619 = vmatprep.subr.mxu0 0.0
    %620 = vmatpush1.msra.mxu0 %v336
    %621 = vmatprep.subr.mxu0 0.0
    %622 = vmatpush1.msra.mxu0 %v333
    %623 = vmatprep.subr.mxu0 0.0
    %624 = vmatpush1.msra.mxu0 %v330
    %625 = vmatprep.subr.mxu0 0.0
    %626 = vmatpush1.msra.mxu0 %v327
    %627 = vmatprep.subr.mxu0 0.0
    %628 = vmatpush1.msra.mxu0 %v324
    %629 = vmatprep.subr.mxu0 0.0
    %630 = vmatpush1.msra.mxu0 %v321
    %631 = vmatprep.subr.mxu0 0.0
    %632 = vmatpush1.msra.mxu0 %v318
    %633 = vmatprep.subr.mxu0 0.0
    %634 = vmatpush1.msra.mxu0 %v315
    %635 = vmatprep.subr.mxu0 0.0
    %636 = vmatpush2.msra.mxu0 0.0
    %637 = vmatprep.subr.mxu0 0.0
    %638 = vmatpush2.msra.mxu0 0.0
    %639 = vmatprep.subr.mxu0 0.0
    %640 = vmatpush2.msra.mxu0 0.0
    %641 = vmatprep.subr.mxu0 0.0
    %642 = vmatpush2.msra.mxu0 0.0
    %643 = vmatprep.subr.mxu0 0.0
    %644 = vmatpush2.msra.mxu0 0.0
    %645 = vmatprep.subr.mxu0 0.0
    %646 = vmatpush2.msra.mxu0 0.0
    %647 = vmatprep.subr.mxu0 0.0
    %648 = vmatpush2.msra.mxu0 0.0
    %649 = vmatprep.subr.mxu0 0.0
    %650 = vmatpush2.msra.mxu0 0.0
    %651 = vmatprep.subr.mxu0 0.0
    %652 = vmatpush2.msra.mxu0 0.0
    %653 = vmatprep.subr.mxu0 0.0
    %654 = vmatpush2.msra.mxu0 0.0
    %655 = vmatprep.subr.mxu0 0.0
    %656 = vmatpush2.msra.mxu0 0.0
    %657 = vmatprep.subr.mxu0 0.0
    %658 = vmatpush2.msra.mxu0 0.0
    %659 = vmatprep.subr.mxu0 0.0
    %660 = vmatpush2.msra.mxu0 0.0
    %661 = vmatprep.subr.mxu0 0.0
    %662 = vmatpush2.msra.mxu0 0.0
    %663 = vmatprep.subr.mxu0 0.0
    %664 = vmatpush2.msra.mxu0 0.0
    %665 = vmatprep.subr.mxu0 0.0
    %666 = vmatpush2.msra.mxu0 0.0
    %667 = vmatprep.mubr.f32.mxu0 0.0
    %668 = vmatmul.mubr.f32.gmra.mxu0 %v530
    %v669 = vpop.f32.mrf.mxu0
    %v670 = vadd.f32 0.0, %v669
    %v671 = vpop.f32.mrf.mxu0
    %672 = vdwg.mxu0
    %v673 = vadd.f32 %v168, %v599
    %v674 = vadd.f32 %v170, %v601
    %v675 = vxor.u32 %v673, 2147483648
    %v676 = vxor.u32 %v674, 2147483648
    %v677 = vmul.f32 %v675, 1.442695
    %v678 = vpow.pop %v677
    %v679 = vmul.f32 %v676, 1.442695
    %v680 = vpow.pop %v679
    %v681 = vadd.f32 %v678, 1.0
    %v682 = vadd.f32 %v680, 1.0
    %v683 = vrcp.pop %v681
    %v684 = vmul.f32 1.0, %v683
    %v685 = vrcp.pop %v682
    %v686 = vmul.f32 1.0, %v685
    %v687 = vadd.f32 %v670, %v366
    %v688 = vmul.f32 %v684, %v687
    %v689 = vadd.f32 %v280, %v688
    %v690 = vtanh.pop %v689
    %v691 = vsub.f32 %v530, %v690
    %v692 = vmul.f32 %v686, %v691
    %v693 = vadd.f32 %v690, %v692
    %s694 = scalar_lea.vmem %s6, 8
    %695 = vst [vmem:[%s694] sm:$0xff] %v693
    %696 = vmatprep.subr.mxu0 %v359
    %697 = vmatpush1.msra.mxu0 %v358
    %698 = vmatprep.subr.mxu0 %v356
    %699 = vmatpush1.msra.mxu0 %v355
    %700 = vmatprep.subr.mxu0 %v353
    %701 = vmatpush1.msra.mxu0 %v352
    %702 = vmatprep.subr.mxu0 %v350
    %703 = vmatpush1.msra.mxu0 %v349
    %704 = vmatprep.subr.mxu0 %v347
    %705 = vmatpush1.msra.mxu0 %v346
    %706 = vmatprep.subr.mxu0 %v344
    %707 = vmatpush1.msra.mxu0 %v343
    %708 = vmatprep.subr.mxu0 %v341
    %709 = vmatpush1.msra.mxu0 %v340
    %710 = vmatprep.subr.mxu0 %v338
    %711 = vmatpush1.msra.mxu0 %v337
    %712 = vmatprep.subr.mxu0 %v335
    %713 = vmatpush1.msra.mxu0 %v334
    %714 = vmatprep.subr.mxu0 %v332
    %715 = vmatpush1.msra.mxu0 %v331
    %716 = vmatprep.subr.mxu0 %v329
    %717 = vmatpush1.msra.mxu0 %v328
    %718 = vmatprep.subr.mxu0 %v326
    %719 = vmatpush1.msra.mxu0 %v325
    %720 = vmatprep.subr.mxu0 %v323
    %721 = vmatpush1.msra.mxu0 %v322
    %722 = vmatprep.subr.mxu0 %v320
    %723 = vmatpush1.msra.mxu0 %v319
    %724 = vmatprep.subr.mxu0 %v317
    %725 = vmatpush1.msra.mxu0 %v316
    %726 = vmatprep.subr.mxu0 %v314
    %727 = vmatpush1.msra.mxu0 %v313
    %728 = vmatprep.subr.mxu0 0.0
    %729 = vmatpush2.msra.mxu0 0.0
    %730 = vmatprep.subr.mxu0 0.0
    %731 = vmatpush2.msra.mxu0 0.0
    %732 = vmatprep.subr.mxu0 0.0
    %733 = vmatpush2.msra.mxu0 0.0
    %734 = vmatprep.subr.mxu0 0.0
    %735 = vmatpush2.msra.mxu0 0.0
    %736 = vmatprep.subr.mxu0 0.0
    %737 = vmatpush2.msra.mxu0 0.0
    %738 = vmatprep.subr.mxu0 0.0
    %739 = vmatpush2.msra.mxu0 0.0
    %740 = vmatprep.subr.mxu0 0.0
    %741 = vmatpush2.msra.mxu0 0.0
    %742 = vmatprep.subr.mxu0 0.0
    %743 = vmatpush2.msra.mxu0 0.0
    %744 = vmatprep.subr.mxu0 0.0
    %745 = vmatpush2.msra.mxu0 0.0
    %746 = vmatprep.subr.mxu0 0.0
    %747 = vmatpush2.msra.mxu0 0.0
    %748 = vmatprep.subr.mxu0 0.0
    %749 = vmatpush2.msra.mxu0 0.0
    %750 = vmatprep.subr.mxu0 0.0
    %751 = vmatpush2.msra.mxu0 0.0
    %752 = vmatprep.subr.mxu0 0.0
    %753 = vmatpush2.msra.mxu0 0.0
    %754 = vmatprep.subr.mxu0 0.0
    %755 = vmatpush2.msra.mxu0 0.0
    %756 = vmatprep.subr.mxu0 0.0
    %757 = vmatpush2.msra.mxu0 0.0
    %758 = vmatprep.subr.mxu0 0.0
    %759 = vmatpush2.msra.mxu0 0.0
    %760 = vmatprep.mubr.f32.mxu0 0.0
    %761 = vmatmul.mubr.f32.gmra.mxu0 %v693
    %v762 = vpop.f32.mrf.mxu0
    %v763 = vadd.f32 0.0, %v762
    %v764 = vpop.f32.mrf.mxu0
    %v765 = vadd.f32 0.0, %v764
    %766 = vdwg.mxu0
    %767 = vmatprep.subr.mxu0 0.0
    %768 = vmatpush1.msra.mxu0 %v360
    %769 = vmatprep.subr.mxu0 0.0
    %770 = vmatpush1.msra.mxu0 %v357
    %771 = vmatprep.subr.mxu0 0.0
    %772 = vmatpush1.msra.mxu0 %v354
    %773 = vmatprep.subr.mxu0 0.0
    %774 = vmatpush1.msra.mxu0 %v351
    %775 = vmatprep.subr.mxu0 0.0
    %776 = vmatpush1.msra.mxu0 %v348
    %777 = vmatprep.subr.mxu0 0.0
    %778 = vmatpush1.msra.mxu0 %v345
    %779 = vmatprep.subr.mxu0 0.0
    %780 = vmatpush1.msra.mxu0 %v342
    %781 = vmatprep.subr.mxu0 0.0
    %782 = vmatpush1.msra.mxu0 %v339
    %783 = vmatprep.subr.mxu0 0.0
    %784 = vmatpush1.msra.mxu0 %v336
    %785 = vmatprep.subr.mxu0 0.0
    %786 = vmatpush1.msra.mxu0 %v333
    %787 = vmatprep.subr.mxu0 0.0
    %788 = vmatpush1.msra.mxu0 %v330
    %789 = vmatprep.subr.mxu0 0.0
    %790 = vmatpush1.msra.mxu0 %v327
    %791 = vmatprep.subr.mxu0 0.0
    %792 = vmatpush1.msra.mxu0 %v324
    %793 = vmatprep.subr.mxu0 0.0
    %794 = vmatpush1.msra.mxu0 %v321
    %795 = vmatprep.subr.mxu0 0.0
    %796 = vmatpush1.msra.mxu0 %v318
    %797 = vmatprep.subr.mxu0 0.0
    %798 = vmatpush1.msra.mxu0 %v315
    %799 = vmatprep.subr.mxu0 0.0
    %800 = vmatpush2.msra.mxu0 0.0
    %801 = vmatprep.subr.mxu0 0.0
    %802 = vmatpush2.msra.mxu0 0.0
    %803 = vmatprep.subr.mxu0 0.0
    %804 = vmatpush2.msra.mxu0 0.0
    %805 = vmatprep.subr.mxu0 0.0
    %806 = vmatpush2.msra.mxu0 0.0
    %807 = vmatprep.subr.mxu0 0.0
    %808 = vmatpush2.msra.mxu0 0.0
    %809 = vmatprep.subr.mxu0 0.0
    %810 = vmatpush2.msra.mxu0 0.0
    %811 = vmatprep.subr.mxu0 0.0
    %812 = vmatpush2.msra.mxu0 0.0
    %813 = vmatprep.subr.mxu0 0.0
    %814 = vmatpush2.msra.mxu0 0.0
    %815 = vmatprep.subr.mxu0 0.0
    %816 = vmatpush2.msra.mxu0 0.0
    %817 = vmatprep.subr.mxu0 0.0
    %818 = vmatpush2.msra.mxu0 0.0
    %819 = vmatprep.subr.mxu0 0.0
    %820 = vmatpush2.msra.mxu0 0.0
    %821 = vmatprep.subr.mxu0 0.0
    %822 = vmatpush2.msra.mxu0 0.0
    %823 = vmatprep.subr.mxu0 0.0
    %824 = vmatpush2.msra.mxu0 0.0
    %825 = vmatprep.subr.mxu0 0.0
    %826 = vmatpush2.msra.mxu0 0.0
    %827 = vmatprep.subr.mxu0 0.0
    %828 = vmatpush2.msra.mxu0 0.0
    %829 = vmatprep.subr.mxu0 0.0
    %830 = vmatpush2.msra.mxu0 0.0
    %831 = vmatprep.mubr.f32.mxu0 0.0
    %832 = vmatmul.mubr.f32.gmra.mxu0 %v693
    %v833 = vpop.f32.mrf.mxu0
    %v834 = vadd.f32 0.0, %v833
    %v835 = vpop.f32.mrf.mxu0
    %836 = vdwg.mxu0
    %v837 = vadd.f32 %v174, %v763
    %v838 = vadd.f32 %v176, %v765
    %v839 = vxor.u32 %v837, 2147483648
    %v840 = vxor.u32 %v838, 2147483648
    %v841 = vmul.f32 %v839, 1.442695
    %v842 = vpow.pop %v841
    %v843 = vmul.f32 %v840, 1.442695
    %v844 = vpow.pop %v843
    %v845 = vadd.f32 %v842, 1.0
    %v846 = vadd.f32 %v844, 1.0
    %v847 = vrcp.pop %v845
    %v848 = vmul.f32 1.0, %v847
    %v849 = vrcp.pop %v846
    %v850 = vmul.f32 1.0, %v849
    %v851 = vadd.f32 %v834, %v366
    %v852 = vmul.f32 %v848, %v851
    %v853 = vadd.f32 %v285, %v852
    %v854 = vtanh.pop %v853
    %v855 = vsub.f32 %v693, %v854
    %v856 = vmul.f32 %v850, %v855
    %v857 = vadd.f32 %v854, %v856
    %s858 = scalar_lea.vmem %s6, 16
    %859 = vst [vmem:[%s858] sm:$0xff] %v857
    %860 = vmatprep.subr.mxu0 %v359
    %861 = vmatpush1.msra.mxu0 %v358
    %862 = vmatprep.subr.mxu0 %v356
    %863 = vmatpush1.msra.mxu0 %v355
    %864 = vmatprep.subr.mxu0 %v353
    %865 = vmatpush1.msra.mxu0 %v352
    %866 = vmatprep.subr.mxu0 %v350
    %867 = vmatpush1.msra.mxu0 %v349
    %868 = vmatprep.subr.mxu0 %v347
    %869 = vmatpush1.msra.mxu0 %v346
    %870 = vmatprep.subr.mxu0 %v344
    %871 = vmatpush1.msra.mxu0 %v343
    %872 = vmatprep.subr.mxu0 %v341
    %873 = vmatpush1.msra.mxu0 %v340
    %874 = vmatprep.subr.mxu0 %v338
    %875 = vmatpush1.msra.mxu0 %v337
    %876 = vmatprep.subr.mxu0 %v335
    %877 = vmatpush1.msra.mxu0 %v334
    %878 = vmatprep.subr.mxu0 %v332
    %879 = vmatpush1.msra.mxu0 %v331
    %880 = vmatprep.subr.mxu0 %v329
    %881 = vmatpush1.msra.mxu0 %v328
    %882 = vmatprep.subr.mxu0 %v326
    %883 = vmatpush1.msra.mxu0 %v325
    %884 = vmatprep.subr.mxu0 %v323
    %885 = vmatpush1.msra.mxu0 %v322
    %886 = vmatprep.subr.mxu0 %v320
    %887 = vmatpush1.msra.mxu0 %v319
    %888 = vmatprep.subr.mxu0 %v317
    %889 = vmatpush1.msra.mxu0 %v316
    %890 = vmatprep.subr.mxu0 %v314
    %891 = vmatpush1.msra.mxu0 %v313
    %892 = vmatprep.subr.mxu0 0.0
    %893 = vmatpush2.msra.mxu0 0.0
    %894 = vmatprep.subr.mxu0 0.0
    %895 = vmatpush2.msra.mxu0 0.0
    %896 = vmatprep.subr.mxu0 0.0
    %897 = vmatpush2.msra.mxu0 0.0
    %898 = vmatprep.subr.mxu0 0.0
    %899 = vmatpush2.msra.mxu0 0.0
    %900 = vmatprep.subr.mxu0 0.0
    %901 = vmatpush2.msra.mxu0 0.0
    %902 = vmatprep.subr.mxu0 0.0
    %903 = vmatpush2.msra.mxu0 0.0
    %904 = vmatprep.subr.mxu0 0.0
    %905 = vmatpush2.msra.mxu0 0.0
    %906 = vmatprep.subr.mxu0 0.0
    %907 = vmatpush2.msra.mxu0 0.0
    %908 = vmatprep.subr.mxu0 0.0
    %909 = vmatpush2.msra.mxu0 0.0
    %910 = vmatprep.subr.mxu0 0.0
    %911 = vmatpush2.msra.mxu0 0.0
    %912 = vmatprep.subr.mxu0 0.0
    %913 = vmatpush2.msra.mxu0 0.0
    %914 = vmatprep.subr.mxu0 0.0
    %915 = vmatpush2.msra.mxu0 0.0
    %916 = vmatprep.subr.mxu0 0.0
    %917 = vmatpush2.msra.mxu0 0.0
    %918 = vmatprep.subr.mxu0 0.0
    %919 = vmatpush2.msra.mxu0 0.0
    %920 = vmatprep.subr.mxu0 0.0
    %921 = vmatpush2.msra.mxu0 0.0
    %922 = vmatprep.subr.mxu0 0.0
    %923 = vmatpush2.msra.mxu0 0.0
    %924 = vmatprep.mubr.f32.mxu0 0.0
    %925 = vmatmul.mubr.f32.gmra.mxu0 %v857
    %v926 = vpop.f32.mrf.mxu0
    %v927 = vadd.f32 0.0, %v926
    %v928 = vpop.f32.mrf.mxu0
    %v929 = vadd.f32 0.0, %v928
    %930 = vdwg.mxu0
    %931 = vmatprep.subr.mxu0 0.0
    %932 = vmatpush1.msra.mxu0 %v360
    %933 = vmatprep.subr.mxu0 0.0
    %934 = vmatpush1.msra.mxu0 %v357
    %935 = vmatprep.subr.mxu0 0.0
    %936 = vmatpush1.msra.mxu0 %v354
    %937 = vmatprep.subr.mxu0 0.0
    %938 = vmatpush1.msra.mxu0 %v351
    %939 = vmatprep.subr.mxu0 0.0
    %940 = vmatpush1.msra.mxu0 %v348
    %941 = vmatprep.subr.mxu0 0.0
    %942 = vmatpush1.msra.mxu0 %v345
    %943 = vmatprep.subr.mxu0 0.0
    %944 = vmatpush1.msra.mxu0 %v342
    %945 = vmatprep.subr.mxu0 0.0
    %946 = vmatpush1.msra.mxu0 %v339
    %947 = vmatprep.subr.mxu0 0.0
    %948 = vmatpush1.msra.mxu0 %v336
    %949 = vmatprep.subr.mxu0 0.0
    %950 = vmatpush1.msra.mxu0 %v333
    %951 = vmatprep.subr.mxu0 0.0
    %952 = vmatpush1.msra.mxu0 %v330
    %953 = vmatprep.subr.mxu0 0.0
    %954 = vmatpush1.msra.mxu0 %v327
    %955 = vmatprep.subr.mxu0 0.0
    %956 = vmatpush1.msra.mxu0 %v324
    %957 = vmatprep.subr.mxu0 0.0
    %958 = vmatpush1.msra.mxu0 %v321
    %959 = vmatprep.subr.mxu0 0.0
    %960 = vmatpush1.msra.mxu0 %v318
    %961 = vmatprep.subr.mxu0 0.0
    %962 = vmatpush1.msra.mxu0 %v315
    %963 = vmatprep.subr.mxu0 0.0
    %964 = vmatpush2.msra.mxu0 0.0
    %965 = vmatprep.subr.mxu0 0.0
    %966 = vmatpush2.msra.mxu0 0.0
    %967 = vmatprep.subr.mxu0 0.0
    %968 = vmatpush2.msra.mxu0 0.0
    %969 = vmatprep.subr.mxu0 0.0
    %970 = vmatpush2.msra.mxu0 0.0
    %971 = vmatprep.subr.mxu0 0.0
    %972 = vmatpush2.msra.mxu0 0.0
    %973 = vmatprep.subr.mxu0 0.0
    %974 = vmatpush2.msra.mxu0 0.0
    %975 = vmatprep.subr.mxu0 0.0
    %976 = vmatpush2.msra.mxu0 0.0
    %977 = vmatprep.subr.mxu0 0.0
    %978 = vmatpush2.msra.mxu0 0.0
    %979 = vmatprep.subr.mxu0 0.0
    %980 = vmatpush2.msra.mxu0 0.0
    %981 = vmatprep.subr.mxu0 0.0
    %982 = vmatpush2.msra.mxu0 0.0
    %983 = vmatprep.subr.mxu0 0.0
    %984 = vmatpush2.msra.mxu0 0.0
    %985 = vmatprep.subr.mxu0 0.0
    %986 = vmatpush2.msra.mxu0 0.0
    %987 = vmatprep.subr.mxu0 0.0
    %988 = vmatpush2.msra.mxu0 0.0
    %989 = vmatprep.subr.mxu0 0.0
    %990 = vmatpush2.msra.mxu0 0.0
    %991 = vmatprep.subr.mxu0 0.0
    %992 = vmatpush2.msra.mxu0 0.0
    %993 = vmatprep.subr.mxu0 0.0
    %994 = vmatpush2.msra.mxu0 0.0
    %995 = vmatprep.mubr.f32.mxu0 0.0
    %996 = vmatmul.mubr.f32.gmra.mxu0 %v857
    %v997 = vpop.f32.mrf.mxu0
    %v998 = vadd.f32 0.0, %v997
    %v999 = vpop.f32.mrf.mxu0
    %1000 = vdwg.mxu0
    %v1001 = vadd.f32 %v180, %v927
    %v1002 = vadd.f32 %v182, %v929
    %v1003 = vxor.u32 %v1001, 2147483648
    %v1004 = vxor.u32 %v1002, 2147483648
    %v1005 = vmul.f32 %v1003, 1.442695
    %v1006 = vpow.pop %v1005
    %v1007 = vmul.f32 %v1004, 1.442695
    %v1008 = vpow.pop %v1007
    %v1009 = vadd.f32 %v1006, 1.0
    %v1010 = vadd.f32 %v1008, 1.0
    %v1011 = vrcp.pop %v1009
    %v1012 = vmul.f32 1.0, %v1011
    %v1013 = vrcp.pop %v1010
    %v1014 = vmul.f32 1.0, %v1013
    %v1015 = vadd.f32 %v998, %v366
    %v1016 = vmul.f32 %v1012, %v1015
    %v1017 = vadd.f32 %v290, %v1016
    %v1018 = vtanh.pop %v1017
    %v1019 = vsub.f32 %v857, %v1018
    %v1020 = vmul.f32 %v1014, %v1019
    %v1021 = vadd.f32 %v1018, %v1020
    %s1022 = scalar_lea.vmem %s6, 24
    %1023 = vst [vmem:[%s1022] sm:$0xff] %v1021
    %1024 = vmatprep.subr.mxu0 %v359
    %1025 = vmatpush1.msra.mxu0 %v358
    %1026 = vmatprep.subr.mxu0 %v356
    %1027 = vmatpush1.msra.mxu0 %v355
    %1028 = vmatprep.subr.mxu0 %v353
    %1029 = vmatpush1.msra.mxu0 %v352
    %1030 = vmatprep.subr.mxu0 %v350
    %1031 = vmatpush1.msra.mxu0 %v349
    %1032 = vmatprep.subr.mxu0 %v347
    %1033 = vmatpush1.msra.mxu0 %v346
    %1034 = vmatprep.subr.mxu0 %v344
    %1035 = vmatpush1.msra.mxu0 %v343
    %1036 = vmatprep.subr.mxu0 %v341
    %1037 = vmatpush1.msra.mxu0 %v340
    %1038 = vmatprep.subr.mxu0 %v338
    %1039 = vmatpush1.msra.mxu0 %v337
    %1040 = vmatprep.subr.mxu0 %v335
    %1041 = vmatpush1.msra.mxu0 %v334
    %1042 = vmatprep.subr.mxu0 %v332
    %1043 = vmatpush1.msra.mxu0 %v331
    %1044 = vmatprep.subr.mxu0 %v329
    %1045 = vmatpush1.msra.mxu0 %v328
    %1046 = vmatprep.subr.mxu0 %v326
    %1047 = vmatpush1.msra.mxu0 %v325
    %1048 = vmatprep.subr.mxu0 %v323
    %1049 = vmatpush1.msra.mxu0 %v322
    %1050 = vmatprep.subr.mxu0 %v320
    %1051 = vmatpush1.msra.mxu0 %v319
    %1052 = vmatprep.subr.mxu0 %v317
    %1053 = vmatpush1.msra.mxu0 %v316
    %1054 = vmatprep.subr.mxu0 %v314
    %1055 = vmatpush1.msra.mxu0 %v313
    %1056 = vmatprep.subr.mxu0 0.0
    %1057 = vmatpush2.msra.mxu0 0.0
    %1058 = vmatprep.subr.mxu0 0.0
    %1059 = vmatpush2.msra.mxu0 0.0
    %1060 = vmatprep.subr.mxu0 0.0
    %1061 = vmatpush2.msra.mxu0 0.0
    %1062 = vmatprep.subr.mxu0 0.0
    %1063 = vmatpush2.msra.mxu0 0.0
    %1064 = vmatprep.subr.mxu0 0.0
    %1065 = vmatpush2.msra.mxu0 0.0
    %1066 = vmatprep.subr.mxu0 0.0
    %1067 = vmatpush2.msra.mxu0 0.0
    %1068 = vmatprep.subr.mxu0 0.0
    %1069 = vmatpush2.msra.mxu0 0.0
    %1070 = vmatprep.subr.mxu0 0.0
    %1071 = vmatpush2.msra.mxu0 0.0
    %1072 = vmatprep.subr.mxu0 0.0
    %1073 = vmatpush2.msra.mxu0 0.0
    %1074 = vmatprep.subr.mxu0 0.0
    %1075 = vmatpush2.msra.mxu0 0.0
    %1076 = vmatprep.subr.mxu0 0.0
    %1077 = vmatpush2.msra.mxu0 0.0
    %1078 = vmatprep.subr.mxu0 0.0
    %1079 = vmatpush2.msra.mxu0 0.0
    %1080 = vmatprep.subr.mxu0 0.0
    %1081 = vmatpush2.msra.mxu0 0.0
    %1082 = vmatprep.subr.mxu0 0.0
    %1083 = vmatpush2.msra.mxu0 0.0
    %1084 = vmatprep.subr.mxu0 0.0
    %1085 = vmatpush2.msra.mxu0 0.0
    %1086 = vmatprep.subr.mxu0 0.0
    %1087 = vmatpush2.msra.mxu0 0.0
    %1088 = vmatprep.mubr.f32.mxu0 0.0
    %1089 = vmatmul.mubr.f32.gmra.mxu0 %v1021
    %v1090 = vpop.f32.mrf.mxu0
    %v1091 = vadd.f32 0.0, %v1090
    %v1092 = vpop.f32.mrf.mxu0
    %v1093 = vadd.f32 0.0, %v1092
    %1094 = vdwg.mxu0
    %1095 = vmatprep.subr.mxu0 0.0
    %1096 = vmatpush1.msra.mxu0 %v360
    %1097 = vmatprep.subr.mxu0 0.0
    %1098 = vmatpush1.msra.mxu0 %v357
    %1099 = vmatprep.subr.mxu0 0.0
    %1100 = vmatpush1.msra.mxu0 %v354
    %1101 = vmatprep.subr.mxu0 0.0
    %1102 = vmatpush1.msra.mxu0 %v351
    %1103 = vmatprep.subr.mxu0 0.0
    %1104 = vmatpush1.msra.mxu0 %v348
    %1105 = vmatprep.subr.mxu0 0.0
    %1106 = vmatpush1.msra.mxu0 %v345
    %1107 = vmatprep.subr.mxu0 0.0
    %1108 = vmatpush1.msra.mxu0 %v342
    %1109 = vmatprep.subr.mxu0 0.0
    %1110 = vmatpush1.msra.mxu0 %v339
    %1111 = vmatprep.subr.mxu0 0.0
    %1112 = vmatpush1.msra.mxu0 %v336
    %1113 = vmatprep.subr.mxu0 0.0
    %1114 = vmatpush1.msra.mxu0 %v333
    %1115 = vmatprep.subr.mxu0 0.0
    %1116 = vmatpush1.msra.mxu0 %v330
    %1117 = vmatprep.subr.mxu0 0.0
    %1118 = vmatpush1.msra.mxu0 %v327
    %1119 = vmatprep.subr.mxu0 0.0
    %1120 = vmatpush1.msra.mxu0 %v324
    %1121 = vmatprep.subr.mxu0 0.0
    %1122 = vmatpush1.msra.mxu0 %v321
    %1123 = vmatprep.subr.mxu0 0.0
    %1124 = vmatpush1.msra.mxu0 %v318
    %1125 = vmatprep.subr.mxu0 0.0
    %1126 = vmatpush1.msra.mxu0 %v315
    %1127 = vmatprep.subr.mxu0 0.0
    %1128 = vmatpush2.msra.mxu0 0.0
    %1129 = vmatprep.subr.mxu0 0.0
    %1130 = vmatpush2.msra.mxu0 0.0
    %1131 = vmatprep.subr.mxu0 0.0
    %1132 = vmatpush2.msra.mxu0 0.0
    %1133 = vmatprep.subr.mxu0 0.0
    %1134 = vmatpush2.msra.mxu0 0.0
    %1135 = vmatprep.subr.mxu0 0.0
    %1136 = vmatpush2.msra.mxu0 0.0
    %1137 = vmatprep.subr.mxu0 0.0
    %1138 = vmatpush2.msra.mxu0 0.0
    %1139 = vmatprep.subr.mxu0 0.0
    %1140 = vmatpush2.msra.mxu0 0.0
    %1141 = vmatprep.subr.mxu0 0.0
    %1142 = vmatpush2.msra.mxu0 0.0
    %1143 = vmatprep.subr.mxu0 0.0
    %1144 = vmatpush2.msra.mxu0 0.0
    %1145 = vmatprep.subr.mxu0 0.0
    %1146 = vmatpush2.msra.mxu0 0.0
    %1147 = vmatprep.subr.mxu0 0.0
    %1148 = vmatpush2.msra.mxu0 0.0
    %1149 = vmatprep.subr.mxu0 0.0
    %1150 = vmatpush2.msra.mxu0 0.0
    %1151 = vmatprep.subr.mxu0 0.0
    %1152 = vmatpush2.msra.mxu0 0.0
    %1153 = vmatprep.subr.mxu0 0.0
    %1154 = vmatpush2.msra.mxu0 0.0
    %1155 = vmatprep.subr.mxu0 0.0
    %1156 = vmatpush2.msra.mxu0 0.0
    %1157 = vmatprep.subr.mxu0 0.0
    %1158 = vmatpush2.msra.mxu0 0.0
    %1159 = vmatprep.mubr.f32.mxu0 0.0
    %1160 = vmatmul.mubr.f32.gmra.mxu0 %v1021
    %v1161 = vpop.f32.mrf.mxu0
    %v1162 = vadd.f32 0.0, %v1161
    %v1163 = vpop.f32.mrf.mxu0
    %1164 = vdwg.mxu0
    %v1165 = vadd.f32 %v186, %v1091
    %v1166 = vadd.f32 %v188, %v1093
    %v1167 = vxor.u32 %v1165, 2147483648
    %v1168 = vxor.u32 %v1166, 2147483648
    %v1169 = vmul.f32 %v1167, 1.442695
    %v1170 = vpow.pop %v1169
    %v1171 = vmul.f32 %v1168, 1.442695
    %v1172 = vpow.pop %v1171
    %v1173 = vadd.f32 %v1170, 1.0
    %v1174 = vadd.f32 %v1172, 1.0
    %v1175 = vrcp.pop %v1173
    %v1176 = vmul.f32 1.0, %v1175
    %v1177 = vrcp.pop %v1174
    %v1178 = vmul.f32 1.0, %v1177
    %v1179 = vadd.f32 %v1162, %v366
    %v1180 = vmul.f32 %v1176, %v1179
    %v1181 = vadd.f32 %v295, %v1180
    %v1182 = vtanh.pop %v1181
    %v1183 = vsub.f32 %v1021, %v1182
    %v1184 = vmul.f32 %v1178, %v1183
    %v1185 = vadd.f32 %v1182, %v1184
    %s1186 = scalar_lea.vmem %s6, 32
    %1187 = vst [vmem:[%s1186] sm:$0xff] %v1185
    %1188 = vmatprep.subr.mxu0 %v359
    %1189 = vmatpush1.msra.mxu0 %v358
    %1190 = vmatprep.subr.mxu0 %v356
    %1191 = vmatpush1.msra.mxu0 %v355
    %1192 = vmatprep.subr.mxu0 %v353
    %1193 = vmatpush1.msra.mxu0 %v352
    %1194 = vmatprep.subr.mxu0 %v350
    %1195 = vmatpush1.msra.mxu0 %v349
    %1196 = vmatprep.subr.mxu0 %v347
    %1197 = vmatpush1.msra.mxu0 %v346
    %1198 = vmatprep.subr.mxu0 %v344
    %1199 = vmatpush1.msra.mxu0 %v343
    %1200 = vmatprep.subr.mxu0 %v341
    %1201 = vmatpush1.msra.mxu0 %v340
    %1202 = vmatprep.subr.mxu0 %v338
    %1203 = vmatpush1.msra.mxu0 %v337
    %1204 = vmatprep.subr.mxu0 %v335
    %1205 = vmatpush1.msra.mxu0 %v334
    %1206 = vmatprep.subr.mxu0 %v332
    %1207 = vmatpush1.msra.mxu0 %v331
    %1208 = vmatprep.subr.mxu0 %v329
    %1209 = vmatpush1.msra.mxu0 %v328
    %1210 = vmatprep.subr.mxu0 %v326
    %1211 = vmatpush1.msra.mxu0 %v325
    %1212 = vmatprep.subr.mxu0 %v323
    %1213 = vmatpush1.msra.mxu0 %v322
    %1214 = vmatprep.subr.mxu0 %v320
    %1215 = vmatpush1.msra.mxu0 %v319
    %1216 = vmatprep.subr.mxu0 %v317
    %1217 = vmatpush1.msra.mxu0 %v316
    %1218 = vmatprep.subr.mxu0 %v314
    %1219 = vmatpush1.msra.mxu0 %v313
    %1220 = vmatprep.subr.mxu0 0.0
    %1221 = vmatpush2.msra.mxu0 0.0
    %1222 = vmatprep.subr.mxu0 0.0
    %1223 = vmatpush2.msra.mxu0 0.0
    %1224 = vmatprep.subr.mxu0 0.0
    %1225 = vmatpush2.msra.mxu0 0.0
    %1226 = vmatprep.subr.mxu0 0.0
    %1227 = vmatpush2.msra.mxu0 0.0
    %1228 = vmatprep.subr.mxu0 0.0
    %1229 = vmatpush2.msra.mxu0 0.0
    %1230 = vmatprep.subr.mxu0 0.0
    %1231 = vmatpush2.msra.mxu0 0.0
    %1232 = vmatprep.subr.mxu0 0.0
    %1233 = vmatpush2.msra.mxu0 0.0
    %1234 = vmatprep.subr.mxu0 0.0
    %1235 = vmatpush2.msra.mxu0 0.0
    %1236 = vmatprep.subr.mxu0 0.0
    %1237 = vmatpush2.msra.mxu0 0.0
    %1238 = vmatprep.subr.mxu0 0.0
    %1239 = vmatpush2.msra.mxu0 0.0
    %1240 = vmatprep.subr.mxu0 0.0
    %1241 = vmatpush2.msra.mxu0 0.0
    %1242 = vmatprep.subr.mxu0 0.0
    %1243 = vmatpush2.msra.mxu0 0.0
    %1244 = vmatprep.subr.mxu0 0.0
    %1245 = vmatpush2.msra.mxu0 0.0
    %1246 = vmatprep.subr.mxu0 0.0
    %1247 = vmatpush2.msra.mxu0 0.0
    %1248 = vmatprep.subr.mxu0 0.0
    %1249 = vmatpush2.msra.mxu0 0.0
    %1250 = vmatprep.subr.mxu0 0.0
    %1251 = vmatpush2.msra.mxu0 0.0
    %1252 = vmatprep.mubr.f32.mxu0 0.0
    %1253 = vmatmul.mubr.f32.gmra.mxu0 %v1185
    %v1254 = vpop.f32.mrf.mxu0
    %v1255 = vadd.f32 0.0, %v1254
    %v1256 = vpop.f32.mrf.mxu0
    %v1257 = vadd.f32 0.0, %v1256
    %1258 = vdwg.mxu0
    %1259 = vmatprep.subr.mxu0 0.0
    %1260 = vmatpush1.msra.mxu0 %v360
    %1261 = vmatprep.subr.mxu0 0.0
    %1262 = vmatpush1.msra.mxu0 %v357
    %1263 = vmatprep.subr.mxu0 0.0
    %1264 = vmatpush1.msra.mxu0 %v354
    %1265 = vmatprep.subr.mxu0 0.0
    %1266 = vmatpush1.msra.mxu0 %v351
    %1267 = vmatprep.subr.mxu0 0.0
    %1268 = vmatpush1.msra.mxu0 %v348
    %1269 = vmatprep.subr.mxu0 0.0
    %1270 = vmatpush1.msra.mxu0 %v345
    %1271 = vmatprep.subr.mxu0 0.0
    %1272 = vmatpush1.msra.mxu0 %v342
    %1273 = vmatprep.subr.mxu0 0.0
    %1274 = vmatpush1.msra.mxu0 %v339
    %1275 = vmatprep.subr.mxu0 0.0
    %1276 = vmatpush1.msra.mxu0 %v336
    %1277 = vmatprep.subr.mxu0 0.0
    %1278 = vmatpush1.msra.mxu0 %v333
    %1279 = vmatprep.subr.mxu0 0.0
    %1280 = vmatpush1.msra.mxu0 %v330
    %1281 = vmatprep.subr.mxu0 0.0
    %1282 = vmatpush1.msra.mxu0 %v327
    %1283 = vmatprep.subr.mxu0 0.0
    %1284 = vmatpush1.msra.mxu0 %v324
    %1285 = vmatprep.subr.mxu0 0.0
    %1286 = vmatpush1.msra.mxu0 %v321
    %1287 = vmatprep.subr.mxu0 0.0
    %1288 = vmatpush1.msra.mxu0 %v318
    %1289 = vmatprep.subr.mxu0 0.0
    %1290 = vmatpush1.msra.mxu0 %v315
    %1291 = vmatprep.subr.mxu0 0.0
    %1292 = vmatpush2.msra.mxu0 0.0
    %1293 = vmatprep.subr.mxu0 0.0
    %1294 = vmatpush2.msra.mxu0 0.0
    %1295 = vmatprep.subr.mxu0 0.0
    %1296 = vmatpush2.msra.mxu0 0.0
    %1297 = vmatprep.subr.mxu0 0.0
    %1298 = vmatpush2.msra.mxu0 0.0
    %1299 = vmatprep.subr.mxu0 0.0
    %1300 = vmatpush2.msra.mxu0 0.0
    %1301 = vmatprep.subr.mxu0 0.0
    %1302 = vmatpush2.msra.mxu0 0.0
    %1303 = vmatprep.subr.mxu0 0.0
    %1304 = vmatpush2.msra.mxu0 0.0
    %1305 = vmatprep.subr.mxu0 0.0
    %1306 = vmatpush2.msra.mxu0 0.0
    %1307 = vmatprep.subr.mxu0 0.0
    %1308 = vmatpush2.msra.mxu0 0.0
    %1309 = vmatprep.subr.mxu0 0.0
    %1310 = vmatpush2.msra.mxu0 0.0
    %1311 = vmatprep.subr.mxu0 0.0
    %1312 = vmatpush2.msra.mxu0 0.0
    %1313 = vmatprep.subr.mxu0 0.0
    %1314 = vmatpush2.msra.mxu0 0.0
    %1315 = vmatprep.subr.mxu0 0.0
    %1316 = vmatpush2.msra.mxu0 0.0
    %1317 = vmatprep.subr.mxu0 0.0
    %1318 = vmatpush2.msra.mxu0 0.0
    %1319 = vmatprep.subr.mxu0 0.0
    %1320 = vmatpush2.msra.mxu0 0.0
    %1321 = vmatprep.subr.mxu0 0.0
    %1322 = vmatpush2.msra.mxu0 0.0
    %1323 = vmatprep.mubr.f32.mxu0 0.0
    %1324 = vmatmul.mubr.f32.gmra.mxu0 %v1185
    %v1325 = vpop.f32.mrf.mxu0
    %v1326 = vadd.f32 0.0, %v1325
    %v1327 = vpop.f32.mrf.mxu0
    %1328 = vdwg.mxu0
    %v1329 = vadd.f32 %v192, %v1255
    %v1330 = vadd.f32 %v194, %v1257
    %v1331 = vxor.u32 %v1329, 2147483648
    %v1332 = vxor.u32 %v1330, 2147483648
    %v1333 = vmul.f32 %v1331, 1.442695
    %v1334 = vpow.pop %v1333
    %v1335 = vmul.f32 %v1332, 1.442695
    %v1336 = vpow.pop %v1335
    %v1337 = vadd.f32 %v1334, 1.0
    %v1338 = vadd.f32 %v1336, 1.0
    %v1339 = vrcp.pop %v1337
    %v1340 = vmul.f32 1.0, %v1339
    %v1341 = vrcp.pop %v1338
    %v1342 = vmul.f32 1.0, %v1341
    %v1343 = vadd.f32 %v1326, %v366
    %v1344 = vmul.f32 %v1340, %v1343
    %v1345 = vadd.f32 %v300, %v1344
    %v1346 = vtanh.pop %v1345
    %v1347 = vsub.f32 %v1185, %v1346
    %v1348 = vmul.f32 %v1342, %v1347
    %v1349 = vadd.f32 %v1346, %v1348
    %s1350 = scalar_lea.vmem %s6, 40
    %1351 = vst [vmem:[%s1350] sm:$0xff] %v1349
    %1352 = vmatprep.subr.mxu0 %v359
    %1353 = vmatpush1.msra.mxu0 %v358
    %1354 = vmatprep.subr.mxu0 %v356
    %1355 = vmatpush1.msra.mxu0 %v355
    %1356 = vmatprep.subr.mxu0 %v353
    %1357 = vmatpush1.msra.mxu0 %v352
    %1358 = vmatprep.subr.mxu0 %v350
    %1359 = vmatpush1.msra.mxu0 %v349
    %1360 = vmatprep.subr.mxu0 %v347
    %1361 = vmatpush1.msra.mxu0 %v346
    %1362 = vmatprep.subr.mxu0 %v344
    %1363 = vmatpush1.msra.mxu0 %v343
    %1364 = vmatprep.subr.mxu0 %v341
    %1365 = vmatpush1.msra.mxu0 %v340
    %1366 = vmatprep.subr.mxu0 %v338
    %1367 = vmatpush1.msra.mxu0 %v337
    %1368 = vmatprep.subr.mxu0 %v335
    %1369 = vmatpush1.msra.mxu0 %v334
    %1370 = vmatprep.subr.mxu0 %v332
    %1371 = vmatpush1.msra.mxu0 %v331
    %1372 = vmatprep.subr.mxu0 %v329
    %1373 = vmatpush1.msra.mxu0 %v328
    %1374 = vmatprep.subr.mxu0 %v326
    %1375 = vmatpush1.msra.mxu0 %v325
    %1376 = vmatprep.subr.mxu0 %v323
    %1377 = vmatpush1.msra.mxu0 %v322
    %1378 = vmatprep.subr.mxu0 %v320
    %1379 = vmatpush1.msra.mxu0 %v319
    %1380 = vmatprep.subr.mxu0 %v317
    %1381 = vmatpush1.msra.mxu0 %v316
    %1382 = vmatprep.subr.mxu0 %v314
    %1383 = vmatpush1.msra.mxu0 %v313
    %1384 = vmatprep.subr.mxu0 0.0
    %1385 = vmatpush2.msra.mxu0 0.0
    %1386 = vmatprep.subr.mxu0 0.0
    %1387 = vmatpush2.msra.mxu0 0.0
    %1388 = vmatprep.subr.mxu0 0.0
    %1389 = vmatpush2.msra.mxu0 0.0
    %1390 = vmatprep.subr.mxu0 0.0
    %1391 = vmatpush2.msra.mxu0 0.0
    %1392 = vmatprep.subr.mxu0 0.0
    %1393 = vmatpush2.msra.mxu0 0.0
    %1394 = vmatprep.subr.mxu0 0.0
    %1395 = vmatpush2.msra.mxu0 0.0
    %1396 = vmatprep.subr.mxu0 0.0
    %1397 = vmatpush2.msra.mxu0 0.0
    %1398 = vmatprep.subr.mxu0 0.0
    %1399 = vmatpush2.msra.mxu0 0.0
    %1400 = vmatprep.subr.mxu0 0.0
    %1401 = vmatpush2.msra.mxu0 0.0
    %1402 = vmatprep.subr.mxu0 0.0
    %1403 = vmatpush2.msra.mxu0 0.0
    %1404 = vmatprep.subr.mxu0 0.0
    %1405 = vmatpush2.msra.mxu0 0.0
    %1406 = vmatprep.subr.mxu0 0.0
    %1407 = vmatpush2.msra.mxu0 0.0
    %1408 = vmatprep.subr.mxu0 0.0
    %1409 = vmatpush2.msra.mxu0 0.0
    %1410 = vmatprep.subr.mxu0 0.0
    %1411 = vmatpush2.msra.mxu0 0.0
    %1412 = vmatprep.subr.mxu0 0.0
    %1413 = vmatpush2.msra.mxu0 0.0
    %1414 = vmatprep.subr.mxu0 0.0
    %1415 = vmatpush2.msra.mxu0 0.0
    %1416 = vmatprep.mubr.f32.mxu0 0.0
    %1417 = vmatmul.mubr.f32.gmra.mxu0 %v1349
    %v1418 = vpop.f32.mrf.mxu0
    %v1419 = vadd.f32 0.0, %v1418
    %v1420 = vpop.f32.mrf.mxu0
    %v1421 = vadd.f32 0.0, %v1420
    %1422 = vdwg.mxu0
    %1423 = vmatprep.subr.mxu0 0.0
    %1424 = vmatpush1.msra.mxu0 %v360
    %1425 = vmatprep.subr.mxu0 0.0
    %1426 = vmatpush1.msra.mxu0 %v357
    %1427 = vmatprep.subr.mxu0 0.0
    %1428 = vmatpush1.msra.mxu0 %v354
    %1429 = vmatprep.subr.mxu0 0.0
    %1430 = vmatpush1.msra.mxu0 %v351
    %1431 = vmatprep.subr.mxu0 0.0
    %1432 = vmatpush1.msra.mxu0 %v348
    %1433 = vmatprep.subr.mxu0 0.0
    %1434 = vmatpush1.msra.mxu0 %v345
    %1435 = vmatprep.subr.mxu0 0.0
    %1436 = vmatpush1.msra.mxu0 %v342
    %1437 = vmatprep.subr.mxu0 0.0
    %1438 = vmatpush1.msra.mxu0 %v339
    %1439 = vmatprep.subr.mxu0 0.0
    %1440 = vmatpush1.msra.mxu0 %v336
    %1441 = vmatprep.subr.mxu0 0.0
    %1442 = vmatpush1.msra.mxu0 %v333
    %1443 = vmatprep.subr.mxu0 0.0
    %1444 = vmatpush1.msra.mxu0 %v330
    %1445 = vmatprep.subr.mxu0 0.0
    %1446 = vmatpush1.msra.mxu0 %v327
    %1447 = vmatprep.subr.mxu0 0.0
    %1448 = vmatpush1.msra.mxu0 %v324
    %1449 = vmatprep.subr.mxu0 0.0
    %1450 = vmatpush1.msra.mxu0 %v321
    %1451 = vmatprep.subr.mxu0 0.0
    %1452 = vmatpush1.msra.mxu0 %v318
    %1453 = vmatprep.subr.mxu0 0.0
    %1454 = vmatpush1.msra.mxu0 %v315
    %1455 = vmatprep.subr.mxu0 0.0
    %1456 = vmatpush2.msra.mxu0 0.0
    %1457 = vmatprep.subr.mxu0 0.0
    %1458 = vmatpush2.msra.mxu0 0.0
    %1459 = vmatprep.subr.mxu0 0.0
    %1460 = vmatpush2.msra.mxu0 0.0
    %1461 = vmatprep.subr.mxu0 0.0
    %1462 = vmatpush2.msra.mxu0 0.0
    %1463 = vmatprep.subr.mxu0 0.0
    %1464 = vmatpush2.msra.mxu0 0.0
    %1465 = vmatprep.subr.mxu0 0.0
    %1466 = vmatpush2.msra.mxu0 0.0
    %1467 = vmatprep.subr.mxu0 0.0
    %1468 = vmatpush2.msra.mxu0 0.0
    %1469 = vmatprep.subr.mxu0 0.0
    %1470 = vmatpush2.msra.mxu0 0.0
    %1471 = vmatprep.subr.mxu0 0.0
    %1472 = vmatpush2.msra.mxu0 0.0
    %1473 = vmatprep.subr.mxu0 0.0
    %1474 = vmatpush2.msra.mxu0 0.0
    %1475 = vmatprep.subr.mxu0 0.0
    %1476 = vmatpush2.msra.mxu0 0.0
    %1477 = vmatprep.subr.mxu0 0.0
    %1478 = vmatpush2.msra.mxu0 0.0
    %1479 = vmatprep.subr.mxu0 0.0
    %1480 = vmatpush2.msra.mxu0 0.0
    %1481 = vmatprep.subr.mxu0 0.0
    %1482 = vmatpush2.msra.mxu0 0.0
    %1483 = vmatprep.subr.mxu0 0.0
    %1484 = vmatpush2.msra.mxu0 0.0
    %1485 = vmatprep.subr.mxu0 0.0
    %1486 = vmatpush2.msra.mxu0 0.0
    %1487 = vmatprep.mubr.f32.mxu0 0.0
    %1488 = vmatmul.mubr.f32.gmra.mxu0 %v1349
    %v1489 = vpop.f32.mrf.mxu0
    %v1490 = vadd.f32 0.0, %v1489
    %v1491 = vpop.f32.mrf.mxu0
    %1492 = vdwg.mxu0
    %v1493 = vadd.f32 %v198, %v1419
    %v1494 = vadd.f32 %v200, %v1421
    %v1495 = vxor.u32 %v1493, 2147483648
    %v1496 = vxor.u32 %v1494, 2147483648
    %v1497 = vmul.f32 %v1495, 1.442695
    %v1498 = vpow.pop %v1497
    %v1499 = vmul.f32 %v1496, 1.442695
    %v1500 = vpow.pop %v1499
    %v1501 = vadd.f32 %v1498, 1.0
    %v1502 = vadd.f32 %v1500, 1.0
    %v1503 = vrcp.pop %v1501
    %v1504 = vmul.f32 1.0, %v1503
    %v1505 = vrcp.pop %v1502
    %v1506 = vmul.f32 1.0, %v1505
    %v1507 = vadd.f32 %v1490, %v366
    %v1508 = vmul.f32 %v1504, %v1507
    %v1509 = vadd.f32 %v305, %v1508
    %v1510 = vtanh.pop %v1509
    %v1511 = vsub.f32 %v1349, %v1510
    %v1512 = vmul.f32 %v1506, %v1511
    %v1513 = vadd.f32 %v1510, %v1512
    %s1514 = scalar_lea.vmem %s6, 48
    %1515 = vst [vmem:[%s1514] sm:$0xff] %v1513
    %1516 = vmatprep.subr.mxu0 %v359
    %1517 = vmatpush1.msra.mxu0 %v358
    %1518 = vmatprep.subr.mxu0 %v356
    %1519 = vmatpush1.msra.mxu0 %v355
    %1520 = vmatprep.subr.mxu0 %v353
    %1521 = vmatpush1.msra.mxu0 %v352
    %1522 = vmatprep.subr.mxu0 %v350
    %1523 = vmatpush1.msra.mxu0 %v349
    %1524 = vmatprep.subr.mxu0 %v347
    %1525 = vmatpush1.msra.mxu0 %v346
    %1526 = vmatprep.subr.mxu0 %v344
    %1527 = vmatpush1.msra.mxu0 %v343
    %1528 = vmatprep.subr.mxu0 %v341
    %1529 = vmatpush1.msra.mxu0 %v340
    %1530 = vmatprep.subr.mxu0 %v338
    %1531 = vmatpush1.msra.mxu0 %v337
    %1532 = vmatprep.subr.mxu0 %v335
    %1533 = vmatpush1.msra.mxu0 %v334
    %1534 = vmatprep.subr.mxu0 %v332
    %1535 = vmatpush1.msra.mxu0 %v331
    %1536 = vmatprep.subr.mxu0 %v329
    %1537 = vmatpush1.msra.mxu0 %v328
    %1538 = vmatprep.subr.mxu0 %v326
    %1539 = vmatpush1.msra.mxu0 %v325
    %1540 = vmatprep.subr.mxu0 %v323
    %1541 = vmatpush1.msra.mxu0 %v322
    %1542 = vmatprep.subr.mxu0 %v320
    %1543 = vmatpush1.msra.mxu0 %v319
    %1544 = vmatprep.subr.mxu0 %v317
    %1545 = vmatpush1.msra.mxu0 %v316
    %1546 = vmatprep.subr.mxu0 %v314
    %1547 = vmatpush1.msra.mxu0 %v313
    %1548 = vmatprep.subr.mxu0 0.0
    %1549 = vmatpush2.msra.mxu0 0.0
    %1550 = vmatprep.subr.mxu0 0.0
    %1551 = vmatpush2.msra.mxu0 0.0
    %1552 = vmatprep.subr.mxu0 0.0
    %1553 = vmatpush2.msra.mxu0 0.0
    %1554 = vmatprep.subr.mxu0 0.0
    %1555 = vmatpush2.msra.mxu0 0.0
    %1556 = vmatprep.subr.mxu0 0.0
    %1557 = vmatpush2.msra.mxu0 0.0
    %1558 = vmatprep.subr.mxu0 0.0
    %1559 = vmatpush2.msra.mxu0 0.0
    %1560 = vmatprep.subr.mxu0 0.0
    %1561 = vmatpush2.msra.mxu0 0.0
    %1562 = vmatprep.subr.mxu0 0.0
    %1563 = vmatpush2.msra.mxu0 0.0
    %1564 = vmatprep.subr.mxu0 0.0
    %1565 = vmatpush2.msra.mxu0 0.0
    %1566 = vmatprep.subr.mxu0 0.0
    %1567 = vmatpush2.msra.mxu0 0.0
    %1568 = vmatprep.subr.mxu0 0.0
    %1569 = vmatpush2.msra.mxu0 0.0
    %1570 = vmatprep.subr.mxu0 0.0
    %1571 = vmatpush2.msra.mxu0 0.0
    %1572 = vmatprep.subr.mxu0 0.0
    %1573 = vmatpush2.msra.mxu0 0.0
    %1574 = vmatprep.subr.mxu0 0.0
    %1575 = vmatpush2.msra.mxu0 0.0
    %1576 = vmatprep.subr.mxu0 0.0
    %1577 = vmatpush2.msra.mxu0 0.0
    %1578 = vmatprep.subr.mxu0 0.0
    %1579 = vmatpush2.msra.mxu0 0.0
    %1580 = vmatprep.mubr.f32.mxu0 0.0
    %1581 = vmatmul.mubr.f32.gmra.mxu0 %v1513
    %v1582 = vpop.f32.mrf.mxu0
    %v1583 = vadd.f32 0.0, %v1582
    %v1584 = vpop.f32.mrf.mxu0
    %v1585 = vadd.f32 0.0, %v1584
    %1586 = vdwg.mxu0
    %1587 = vmatprep.subr.mxu0 0.0
    %1588 = vmatpush1.msra.mxu0 %v360
    %1589 = vmatprep.subr.mxu0 0.0
    %1590 = vmatpush1.msra.mxu0 %v357
    %1591 = vmatprep.subr.mxu0 0.0
    %1592 = vmatpush1.msra.mxu0 %v354
    %1593 = vmatprep.subr.mxu0 0.0
    %1594 = vmatpush1.msra.mxu0 %v351
    %1595 = vmatprep.subr.mxu0 0.0
    %1596 = vmatpush1.msra.mxu0 %v348
    %1597 = vmatprep.subr.mxu0 0.0
    %1598 = vmatpush1.msra.mxu0 %v345
    %1599 = vmatprep.subr.mxu0 0.0
    %1600 = vmatpush1.msra.mxu0 %v342
    %1601 = vmatprep.subr.mxu0 0.0
    %1602 = vmatpush1.msra.mxu0 %v339
    %1603 = vmatprep.subr.mxu0 0.0
    %1604 = vmatpush1.msra.mxu0 %v336
    %1605 = vmatprep.subr.mxu0 0.0
    %1606 = vmatpush1.msra.mxu0 %v333
    %1607 = vmatprep.subr.mxu0 0.0
    %1608 = vmatpush1.msra.mxu0 %v330
    %1609 = vmatprep.subr.mxu0 0.0
    %1610 = vmatpush1.msra.mxu0 %v327
    %1611 = vmatprep.subr.mxu0 0.0
    %1612 = vmatpush1.msra.mxu0 %v324
    %1613 = vmatprep.subr.mxu0 0.0
    %1614 = vmatpush1.msra.mxu0 %v321
    %1615 = vmatprep.subr.mxu0 0.0
    %1616 = vmatpush1.msra.mxu0 %v318
    %1617 = vmatprep.subr.mxu0 0.0
    %1618 = vmatpush1.msra.mxu0 %v315
    %1619 = vmatprep.subr.mxu0 0.0
    %1620 = vmatpush2.msra.mxu0 0.0
    %1621 = vmatprep.subr.mxu0 0.0
    %1622 = vmatpush2.msra.mxu0 0.0
    %1623 = vmatprep.subr.mxu0 0.0
    %1624 = vmatpush2.msra.mxu0 0.0
    %1625 = vmatprep.subr.mxu0 0.0
    %1626 = vmatpush2.msra.mxu0 0.0
    %1627 = vmatprep.subr.mxu0 0.0
    %1628 = vmatpush2.msra.mxu0 0.0
    %1629 = vmatprep.subr.mxu0 0.0
    %1630 = vmatpush2.msra.mxu0 0.0
    %1631 = vmatprep.subr.mxu0 0.0
    %1632 = vmatpush2.msra.mxu0 0.0
    %1633 = vmatprep.subr.mxu0 0.0
    %1634 = vmatpush2.msra.mxu0 0.0
    %1635 = vmatprep.subr.mxu0 0.0
    %1636 = vmatpush2.msra.mxu0 0.0
    %1637 = vmatprep.subr.mxu0 0.0
    %1638 = vmatpush2.msra.mxu0 0.0
    %1639 = vmatprep.subr.mxu0 0.0
    %1640 = vmatpush2.msra.mxu0 0.0
    %1641 = vmatprep.subr.mxu0 0.0
    %1642 = vmatpush2.msra.mxu0 0.0
    %1643 = vmatprep.subr.mxu0 0.0
    %1644 = vmatpush2.msra.mxu0 0.0
    %1645 = vmatprep.subr.mxu0 0.0
    %1646 = vmatpush2.msra.mxu0 0.0
    %1647 = vmatprep.subr.mxu0 0.0
    %1648 = vmatpush2.msra.mxu0 0.0
    %1649 = vmatprep.subr.mxu0 0.0
    %1650 = vmatpush2.msra.mxu0 0.0
    %1651 = vmatprep.mubr.f32.mxu0 0.0
    %1652 = vmatmul.mubr.f32.gmra.mxu0 %v1513
    %v1653 = vpop.f32.mrf.mxu0
    %v1654 = vadd.f32 0.0, %v1653
    %v1655 = vpop.f32.mrf.mxu0
    %1656 = vdwg.mxu0
    %v1657 = vadd.f32 %v204, %v1583
    %v1658 = vadd.f32 %v206, %v1585
    %v1659 = vxor.u32 %v1657, 2147483648
    %v1660 = vxor.u32 %v1658, 2147483648
    %v1661 = vmul.f32 %v1659, 1.442695
    %v1662 = vpow.pop %v1661
    %v1663 = vmul.f32 %v1660, 1.442695
    %v1664 = vpow.pop %v1663
    %v1665 = vadd.f32 %v1662, 1.0
    %v1666 = vadd.f32 %v1664, 1.0
    %v1667 = vrcp.pop %v1665
    %v1668 = vmul.f32 1.0, %v1667
    %v1669 = vrcp.pop %v1666
    %v1670 = vmul.f32 1.0, %v1669
    %v1671 = vadd.f32 %v1654, %v366
    %v1672 = vmul.f32 %v1668, %v1671
    %v1673 = vadd.f32 %v310, %v1672
    %v1674 = vtanh.pop %v1673
    %v1675 = vsub.f32 %v1513, %v1674
    %v1676 = vmul.f32 %v1670, %v1675
    %v1677 = vadd.f32 %v1674, %v1676
    %s1678 = scalar_lea.vmem %s6, 56
    %1679 = vst [vmem:[%s1678] sm:$0xff] %v1677
    %1680 = vst [vmem:[%s7] sm:$0xff] %v1677
    // Predicated region
    $region30: #{gru_forward.1} parent=1 // pred_check
      _
    $region31: #{gru_forward.1} parent=1 // pred_check_branch
      %1682 = sbr.rel (0) target = $region33
    $region32: #{gru_forward.1} parent=1 // pred_region
      _
    $region33: #{gru_forward.1} parent=1 // pred_fallthru
      _
    // Predicated region
    $region34: #{gru_forward.1} parent=1 // pred_check
      _
    $region35: #{gru_forward.1} parent=1 // pred_check_branch
      %1684 = sbr.rel (0) target = $region37
    $region36: #{gru_forward.1} parent=1 // pred_region
      _
    $region37: #{gru_forward.1} parent=1 // pred_fallthru
      _
    // Predicated region
    $region38: #{gru_forward.1} parent=1 // pred_check
      _
    $region39: #{gru_forward.1} parent=1 // pred_check_branch
      %1686 = sbr.rel (0) target = $region41
    $region40: #{gru_forward.1} parent=1 // pred_region
      _
    $region41: #{gru_forward.1} parent=1 // pred_fallthru
      _
    // Predicated region
    $region42: #{gru_forward.1} parent=1 // pred_check
      _
    $region43: #{gru_forward.1} parent=1 // pred_check_branch
      %1688 = sbr.rel (0) target = $region45
    $region44: #{gru_forward.1} parent=1 // pred_region
      _
    $region45: #{gru_forward.1} parent=1 // pred_fallthru
      _
    %1689 = vsyncpa [#allocation3], 1

</llo_original>
